<compile_context>
chip_gen: v6e
topology: v6e:2x2x1
jax: 0.10.0
libtpu: 0.0.40
codegen_flags: <defaults>
</compile_context>

<pallas_src>
import jax
import jax.numpy as jnp
import numpy as np
from jax.experimental import pallas as pl
from jax.experimental.pallas import tpu as pltpu

_EPS = 1e-5  # nn.BatchNorm2d default


def shuffle_plug_kernel(x_ref, w1_ref, w2_ref, p_ref, o_ref):
    """Whole-array VMEM refs, single grid step.

    x_ref : (C, N*H, W)        activations, row m = n*H + h, lane = w
    w1_ref: (C, W, W)          w1^T broadcast along C   (conv1: mixes W / lanes)
    w2_ref: (C, N*H, N*H)      I_N (x) w2 broadcast along C (conv2: mixes H inside N*H)
    p_ref : (4, C, 1, 1)       packed BN affine params [g1, b1, g2, b2]
    o_ref : (C, N*H, W)        output
    """
    x = x_ref[...]
    inv_cnt = 1.0 / (x.shape[1] * x.shape[2])      # 1 / (N*H*W), static

    def bn(t, g, b):
        # Per-channel (leading axis) training-mode batch stats.
        # Two-pass variance (subtract mean, then square) — no E[x^2]-E[x]^2
        # cancellation.  Lane reduce then sublane reduce (XLU path), all f32.
        s = jnp.sum(jnp.sum(t, axis=2, keepdims=True), axis=1, keepdims=True)
        mean = s * inv_cnt
        d = t - mean
        var = jnp.sum(jnp.sum(d * d, axis=2, keepdims=True),
                      axis=1, keepdims=True) * inv_cnt
        scale = g * jax.lax.rsqrt(var + _EPS)
        return d * scale + b

    g1 = p_ref[0]   # (C, 1, 1)
    b1 = p_ref[1]
    g2 = p_ref[2]
    b2 = p_ref[3]

    # conv1 (mixes W): batched matmul over C, contraction K = W = 16.
    z = jnp.einsum('cmw,cwv->cmv', x, w1_ref[...],
                   preferred_element_type=jnp.float32)
    z = bn(z, g1, b1)                               # bn1 ; relu1=False branch

    # conv2 (mixes H via the block-diagonal I_N (x) w2 on the N*H axis).
    u = jnp.einsum('cgm,cmv->cgv', w2_ref[...], z,
                   preferred_element_type=jnp.float32)
    u = bn(u, g2, b2)                               # bn2

    # Residual + relu (relu2=True branch).
    o_ref[...] = jnp.maximum(u + x, 0.0)
    # TODO(synk): BatchNorm running_mean/running_var buffer updates (training-mode
    # side effect) and the unused relu2=False path `self.linear(out + shortcut)`
    # are not emitted.


@jax.jit
def shuffle_plug_forward(x, w1, w2, g1, b1, g2, b2):
    N, C, H, W = x.shape
    Wout, Win = w1.shape
    Hout, Hin = w2.shape
    # The residual add silently requires square 1x1 convs — fail loudly otherwise.
    assert Win == W and Wout == W, "conv1 must be square with in_ch1 == out_ch1 == W"
    assert Hin == H and Hout == H, "conv2 must be square with in_ch2 == out_ch2 == H"
    dt = x.dtype

    # Wrapper-side layout plumbing (cheap XLA ops, not in-kernel work):
    # (C, N*H, W) view; row index m = n*H + h, lane index = w.
    x3 = jnp.transpose(x, (1, 0, 2, 3)).reshape(C, N * H, W)

    # Small structured weights (total ~20 KiB, vs ~2 MiB of zero-padded kron before):
    #   conv1: per-channel right-multiply by w1^T                       (W x W)
    #   conv2: per-channel left-multiply by I_N (x) w2                  (N*H x N*H)
    # Pre-broadcast along C so the kernel uses only plain batched matmuls.
    w1b = jnp.broadcast_to(w1.T.astype(dt)[None], (C, W, W))
    w2k = jnp.kron(jnp.eye(N, dtype=dt), w2.astype(dt))                 # (N*H, N*H)
    w2b = jnp.broadcast_to(w2k[None], (C, N * H, N * H))

    # Pack all four BN affine params into one small input: (4, C, 1, 1).
    p = jnp.stack([g1.reshape(C), b1.reshape(C),
                   g2.reshape(C), b2.reshape(C)]).astype(dt).reshape(4, C, 1, 1)

    vmem = pl.BlockSpec(memory_space=pltpu.MemorySpace.VMEM)
    out3 = pl.pallas_call(
        shuffle_plug_kernel,
        out_shape=jax.ShapeDtypeStruct((C, N * H, W), dt),
        in_specs=[vmem] * 4,
        out_specs=vmem,
    )(x3, w1b, w2b, p)

    # Back to NCHW (free plumbing in XLA).
    return jnp.transpose(out3.reshape(C, N, H, W), (1, 0, 2, 3))


def shuffle_plug_reference(x, w1, w2, g1, b1, g2, b2):
    """Pure-JAX transcription of the PyTorch forward (module defaults)."""
    def bn(t, g, b):
        m = jnp.mean(t, axis=(0, 2, 3), keepdims=True)
        v = jnp.mean((t - m) ** 2, axis=(0, 2, 3), keepdims=True)
        return (t - m) / jnp.sqrt(v + _EPS) * g + b

    shortcut = x
    out = jnp.transpose(x, (0, 3, 1, 2))            # position_coding('NCWH','NHCW')
    out = jnp.einsum('niab,oi->noab', out, w1)      # conv1 (1x1, no bias)
    out = bn(jnp.transpose(out, (0, 2, 3, 1)), g1, b1)   # relu1=False branch
    out = jnp.transpose(out, (0, 2, 3, 1))          # position_coding('NCWH','NWHC')
    out = jnp.einsum('niab,oi->noab', out, w2)      # conv2 (1x1, no bias)
    out = jnp.transpose(out, (0, 3, 1, 2))          # position_coding('NWHC','NCWH')
    out = bn(out, g2, b2)
    return jnp.maximum(out + shortcut, 0.0)         # relu2=True branch


if __name__ == "__main__":
    N, C, H, W = 2, 4, 16, 16
    in_ch1 = out_ch1 = W      # conv1 operates on the W axis
    in_ch2 = out_ch2 = H      # conv2 operates on the H axis
    bn_ch = C                 # BatchNorm channel count

    key = jax.random.PRNGKey(0)
    kx, k1, k2, kg1, kb1, kg2, kb2 = jax.random.split(key, 7)

    x = jax.random.normal(kx, (N, C, H, W), jnp.float32)

    # Deterministic parameter init (kaiming-uniform-style bound 1/sqrt(fan_in)
    # for the 1x1 convs; perturbed affine params for the BatchNorms).
    bound1 = 1.0 / jnp.sqrt(jnp.float32(in_ch1))
    bound2 = 1.0 / jnp.sqrt(jnp.float32(in_ch2))
    w1 = jax.random.uniform(k1, (out_ch1, in_ch1), jnp.float32, -bound1, bound1)
    w2 = jax.random.uniform(k2, (out_ch2, in_ch2), jnp.float32, -bound2, bound2)
    g1 = 1.0 + 0.1 * jax.random.normal(kg1, (1, bn_ch, 1, 1), jnp.float32)
    b1 = 0.1 * jax.random.normal(kb1, (1, bn_ch, 1, 1), jnp.float32)
    g2 = 1.0 + 0.1 * jax.random.normal(kg2, (1, bn_ch, 1, 1), jnp.float32)
    b2 = 0.1 * jax.random.normal(kb2, (1, bn_ch, 1, 1), jnp.float32)

    out = jax.block_until_ready(shuffle_plug_forward(x, w1, w2, g1, b1, g2, b2))
    ref = jax.block_until_ready(shuffle_plug_reference(x, w1, w2, g1, b1, g2, b2))

    # Two-pass BN variance removed the cancellation issue; remaining slack only
    # covers default-precision MXU rounding shared with the XLA reference.
    np.testing.assert_allclose(np.asarray(out), np.asarray(ref), rtol=1e-2, atol=1e-2)
    print("KERNEL_OK")
</pallas_src>

<mosaic_0001>
module attributes {stable_mosaic.version = 11 : i64} {
  func.func @shuffle_plug_kernel(%arg0: memref<4x32x16xf32, #tpu.memory_space<vmem>>, %arg1: memref<4x16x16xf32, #tpu.memory_space<vmem>>, %arg2: memref<4x32x32xf32, #tpu.memory_space<vmem>>, %arg3: memref<4x4x1x1xf32, #tpu.memory_space<vmem>>, %arg4: memref<4x32x16xf32, #tpu.memory_space<vmem>>) attributes {dimension_semantics = [], scalar_prefetch = 0 : i64, scratch_operands = 0 : i64, tpu.core_type = #tpu.core_type<tc>} {
    %c0 = arith.constant 0 : index
    %c0_0 = arith.constant 0 : index
    %c0_1 = arith.constant 0 : index
    %0 = vector.load %arg0[%c0, %c0_0, %c0_1] : memref<4x32x16xf32, #tpu.memory_space<vmem>>, vector<4x32x16xf32>
    %c0_2 = arith.constant 0 : index
    %c0_3 = arith.constant 0 : index
    %c0_4 = arith.constant 0 : index
    %c0_5 = arith.constant 0 : index
    %1 = vector.load %arg3[%c0_2, %c0_3, %c0_4, %c0_5] : memref<4x4x1x1xf32, #tpu.memory_space<vmem>>, vector<1x4x1x1xf32>
    %2 = vector.shape_cast %1 : vector<1x4x1x1xf32> to vector<4x1x1xf32>
    %c1 = arith.constant 1 : index
    %c0_6 = arith.constant 0 : index
    %c0_7 = arith.constant 0 : index
    %c0_8 = arith.constant 0 : index
    %3 = vector.load %arg3[%c1, %c0_6, %c0_7, %c0_8] : memref<4x4x1x1xf32, #tpu.memory_space<vmem>>, vector<1x4x1x1xf32>
    %4 = vector.shape_cast %3 : vector<1x4x1x1xf32> to vector<4x1x1xf32>
    %c2 = arith.constant 2 : index
    %c0_9 = arith.constant 0 : index
    %c0_10 = arith.constant 0 : index
    %c0_11 = arith.constant 0 : index
    %5 = vector.load %arg3[%c2, %c0_9, %c0_10, %c0_11] : memref<4x4x1x1xf32, #tpu.memory_space<vmem>>, vector<1x4x1x1xf32>
    %6 = vector.shape_cast %5 : vector<1x4x1x1xf32> to vector<4x1x1xf32>
    %c3 = arith.constant 3 : index
    %c0_12 = arith.constant 0 : index
    %c0_13 = arith.constant 0 : index
    %c0_14 = arith.constant 0 : index
    %7 = vector.load %arg3[%c3, %c0_12, %c0_13, %c0_14] : memref<4x4x1x1xf32, #tpu.memory_space<vmem>>, vector<1x4x1x1xf32>
    %8 = vector.shape_cast %7 : vector<1x4x1x1xf32> to vector<4x1x1xf32>
    %c0_15 = arith.constant 0 : index
    %c0_16 = arith.constant 0 : index
    %c0_17 = arith.constant 0 : index
    %9 = vector.load %arg1[%c0_15, %c0_16, %c0_17] : memref<4x16x16xf32, #tpu.memory_space<vmem>>, vector<4x16x16xf32>
    "tpu.trace_start"() <{level = 10 : i32, message = "cmw,cwv->cmv"}> : () -> ()
    %cst = arith.constant dense<0.000000e+00> : vector<4x32x16xf32>
    %10 = tpu.matmul %0, %9, %cst {dimension_numbers = #tpu.dot_dimension_numbers<[2], [1], [1], [2], [0, 0, 0, 1, 1, 2], [0], [0]>} : vector<4x32x16xf32>, vector<4x16x16xf32>, vector<4x32x16xf32> -> vector<4x32x16xf32>
    "tpu.trace_stop"() : () -> ()
    %cst_18 = arith.constant dense<0.000000e+00> : vector<4x32xf32>
    %11 = vector.multi_reduction <add>, %10, %cst_18 [2] : vector<4x32x16xf32> to vector<4x32xf32>
    %12 = vector.shape_cast %11 : vector<4x32xf32> to vector<4x32x1xf32>
    %cst_19 = arith.constant dense<0.000000e+00> : vector<4x1xf32>
    %13 = vector.multi_reduction <add>, %12, %cst_19 [1] : vector<4x32x1xf32> to vector<4x1xf32>
    %14 = vector.shape_cast %13 : vector<4x1xf32> to vector<4x1x1xf32>
    %cst_20 = arith.constant 0.001953125 : f32
    %15 = vector.broadcast %cst_20 : f32 to vector<4x1x1xf32>
    %16 = arith.mulf %14, %15 : vector<4x1x1xf32>
    %17 = vector.broadcast %16 : vector<4x1x1xf32> to vector<4x32x16xf32>
    %18 = arith.subf %10, %17 : vector<4x32x16xf32>
    %19 = arith.mulf %18, %18 : vector<4x32x16xf32>
    %cst_21 = arith.constant dense<0.000000e+00> : vector<4x32xf32>
    %20 = vector.multi_reduction <add>, %19, %cst_21 [2] : vector<4x32x16xf32> to vector<4x32xf32>
    %21 = vector.shape_cast %20 : vector<4x32xf32> to vector<4x32x1xf32>
    %cst_22 = arith.constant dense<0.000000e+00> : vector<4x1xf32>
    %22 = vector.multi_reduction <add>, %21, %cst_22 [1] : vector<4x32x1xf32> to vector<4x1xf32>
    %23 = vector.shape_cast %22 : vector<4x1xf32> to vector<4x1x1xf32>
    %cst_23 = arith.constant 0.001953125 : f32
    %24 = vector.broadcast %cst_23 : f32 to vector<4x1x1xf32>
    %25 = arith.mulf %23, %24 : vector<4x1x1xf32>
    %cst_24 = arith.constant 9.99999974E-6 : f32
    %26 = vector.broadcast %cst_24 : f32 to vector<4x1x1xf32>
    %27 = arith.addf %25, %26 : vector<4x1x1xf32>
    %28 = math.rsqrt %27 : vector<4x1x1xf32>
    %29 = arith.mulf %2, %28 : vector<4x1x1xf32>
    %30 = vector.broadcast %29 : vector<4x1x1xf32> to vector<4x32x16xf32>
    %31 = arith.mulf %18, %30 : vector<4x32x16xf32>
    %32 = vector.broadcast %4 : vector<4x1x1xf32> to vector<4x32x16xf32>
    %33 = arith.addf %31, %32 : vector<4x32x16xf32>
    %c0_25 = arith.constant 0 : index
    %c0_26 = arith.constant 0 : index
    %c0_27 = arith.constant 0 : index
    %34 = vector.load %arg2[%c0_25, %c0_26, %c0_27] : memref<4x32x32xf32, #tpu.memory_space<vmem>>, vector<4x32x32xf32>
    "tpu.trace_start"() <{level = 10 : i32, message = "cgm,cmv->cgv"}> : () -> ()
    %cst_28 = arith.constant dense<0.000000e+00> : vector<4x32x16xf32>
    %35 = tpu.matmul %34, %33, %cst_28 {dimension_numbers = #tpu.dot_dimension_numbers<[2], [1], [1], [2], [0, 0, 0, 1, 1, 2], [0], [0]>} : vector<4x32x32xf32>, vector<4x32x16xf32>, vector<4x32x16xf32> -> vector<4x32x16xf32>
    "tpu.trace_stop"() : () -> ()
    %cst_29 = arith.constant dense<0.000000e+00> : vector<4x32xf32>
    %36 = vector.multi_reduction <add>, %35, %cst_29 [2] : vector<4x32x16xf32> to vector<4x32xf32>
    %37 = vector.shape_cast %36 : vector<4x32xf32> to vector<4x32x1xf32>
    %cst_30 = arith.constant dense<0.000000e+00> : vector<4x1xf32>
    %38 = vector.multi_reduction <add>, %37, %cst_30 [1] : vector<4x32x1xf32> to vector<4x1xf32>
    %39 = vector.shape_cast %38 : vector<4x1xf32> to vector<4x1x1xf32>
    %cst_31 = arith.constant 0.001953125 : f32
    %40 = vector.broadcast %cst_31 : f32 to vector<4x1x1xf32>
    %41 = arith.mulf %39, %40 : vector<4x1x1xf32>
    %42 = vector.broadcast %41 : vector<4x1x1xf32> to vector<4x32x16xf32>
    %43 = arith.subf %35, %42 : vector<4x32x16xf32>
    %44 = arith.mulf %43, %43 : vector<4x32x16xf32>
    %cst_32 = arith.constant dense<0.000000e+00> : vector<4x32xf32>
    %45 = vector.multi_reduction <add>, %44, %cst_32 [2] : vector<4x32x16xf32> to vector<4x32xf32>
    %46 = vector.shape_cast %45 : vector<4x32xf32> to vector<4x32x1xf32>
    %cst_33 = arith.constant dense<0.000000e+00> : vector<4x1xf32>
    %47 = vector.multi_reduction <add>, %46, %cst_33 [1] : vector<4x32x1xf32> to vector<4x1xf32>
    %48 = vector.shape_cast %47 : vector<4x1xf32> to vector<4x1x1xf32>
    %cst_34 = arith.constant 0.001953125 : f32
    %49 = vector.broadcast %cst_34 : f32 to vector<4x1x1xf32>
    %50 = arith.mulf %48, %49 : vector<4x1x1xf32>
    %cst_35 = arith.constant 9.99999974E-6 : f32
    %51 = vector.broadcast %cst_35 : f32 to vector<4x1x1xf32>
    %52 = arith.addf %50, %51 : vector<4x1x1xf32>
    %53 = math.rsqrt %52 : vector<4x1x1xf32>
    %54 = arith.mulf %6, %53 : vector<4x1x1xf32>
    %55 = vector.broadcast %54 : vector<4x1x1xf32> to vector<4x32x16xf32>
    %56 = arith.mulf %43, %55 : vector<4x32x16xf32>
    %57 = vector.broadcast %8 : vector<4x1x1xf32> to vector<4x32x16xf32>
    %58 = arith.addf %56, %57 : vector<4x32x16xf32>
    %59 = arith.addf %58, %0 : vector<4x32x16xf32>
    %cst_36 = arith.constant 0.000000e+00 : f32
    %60 = vector.broadcast %cst_36 : f32 to vector<4x32x16xf32>
    %61 = arith.maximumf %59, %60 : vector<4x32x16xf32>
    %c0_37 = arith.constant 0 : index
    %c0_38 = arith.constant 0 : index
    %c0_39 = arith.constant 0 : index
    %62 = vector.load %arg4[%c0_37, %c0_38, %c0_39] : memref<4x32x16xf32, #tpu.memory_space<vmem>>, vector<4x32x16xf32>
    tpu.vector_store %arg4[%c0_37, %c0_38, %c0_39], %61 {strides = array<i32>} : memref<4x32x16xf32, #tpu.memory_space<vmem>>, vector<4x32x16xf32>,
    return
  }
}

</mosaic_0001>

<llo_original>
// kernel: shuffle_plug_forward.1
$region0: #{shuffle_plug_forward.1}
  #allocation0 [shape = 'u32[]', space=smem, size = 0x4, offset = 0x4, fixed_abs, tag = 'smem constant byte address 0x4 - core index']
  #allocation1 [shape = 'u32[144,128]{1,0:T(1,128)}', space=vmem, size = 0x12000, scoped, tag = 'internal scratch']
  %s0 = inlined_call_operand.vmem [shape: f32[4,32,16], index: 0, kind: input, shape index: {}]
  %s1 = inlined_call_operand.vmem [shape: f32[4,16,16], index: 1, kind: input, shape index: {}]
  %s2 = inlined_call_operand.vmem [shape: f32[4,32,32], index: 2, kind: input, shape index: {}]
  %s3 = inlined_call_operand.vmem [shape: f32[4,4,1,1], index: 3, kind: input, shape index: {}]
  %s4 = inlined_call_operand.vmem [shape: f32[4,32,16], index: 4, kind: output, shape index: {}]
  %s5 = sld [smem:[#allocation0]]
  $region26: #{shuffle_plug_forward.1} parent=0
    _
  %s7 = ssub.s32 1, %s5
  %s8 = scalar_select 0, %s7, %s5
  // Predicated region
  $region2: #{shuffle_plug_forward.1} parent=0 // pred_check
    _
  $region3: #{shuffle_plug_forward.1} parent=0 // pred_check_branch
    %10 = sbr.rel (0) target = $region5
  $region4: #{shuffle_plug_forward.1} parent=0 // pred_region
    _
  $region5: #{shuffle_plug_forward.1} parent=0 // pred_fallthru
    _
  // Predicated region
  $region6: #{shuffle_plug_forward.1} parent=0 // pred_check
    _
  $region7: #{shuffle_plug_forward.1} parent=0 // pred_check_branch
    %12 = sbr.rel (0) target = $region9
  $region8: #{shuffle_plug_forward.1} parent=0 // pred_region
    _
  $region9: #{shuffle_plug_forward.1} parent=0 // pred_fallthru
    _
  // Predicated region
  $region10: #{shuffle_plug_forward.1} parent=0 // pred_check
    _
  $region11: #{shuffle_plug_forward.1} parent=0 // pred_check_branch
    %14 = sbr.rel (0) target = $region13
  $region12: #{shuffle_plug_forward.1} parent=0 // pred_region
    _
  $region13: #{shuffle_plug_forward.1} parent=0 // pred_fallthru
    _
  // Predicated region
  $region14: #{shuffle_plug_forward.1} parent=0 // pred_check
    _
  $region15: #{shuffle_plug_forward.1} parent=0 // pred_check_branch
    %16 = sbr.rel (0) target = $region17
  $region16: #{shuffle_plug_forward.1} parent=0 // pred_region
    _
  $region17: #{shuffle_plug_forward.1} parent=0 // pred_fallthru
    _
  %v17 = vld [vmem:[%s0] sm:$0xff]
  %v18 = vld [vmem:[%s0 + $0x8] sm:$0xff]
  %v19 = vld [vmem:[%s0 + $0x10] sm:$0xff]
  %v20 = vld [vmem:[%s0 + $0x18] sm:$0xff]
  %v21 = vld [vmem:[%s0 + $0x20] sm:$0xff]
  %v22 = vld [vmem:[%s0 + $0x28] sm:$0xff]
  %v23 = vld [vmem:[%s0 + $0x30] sm:$0xff]
  %v24 = vld [vmem:[%s0 + $0x38] sm:$0xff]
  %v25 = vld [vmem:[%s0 + $0x40] sm:$0xff]
  %v26 = vld [vmem:[%s0 + $0x48] sm:$0xff]
  %v27 = vld [vmem:[%s0 + $0x50] sm:$0xff]
  %v28 = vld [vmem:[%s0 + $0x58] sm:$0xff]
  %v29 = vld [vmem:[%s0 + $0x60] sm:$0xff]
  %v30 = vld [vmem:[%s0 + $0x68] sm:$0xff]
  %v31 = vld [vmem:[%s0 + $0x70] sm:$0xff]
  %v32 = vld [vmem:[%s0 + $0x78] sm:$0xff]
  %v33 = vld [vmem:[%s3] sm:$0x1]
  %v34 = vld [vmem:[%s3 + $0x1] sm:$0x1]
  %v35 = vld [vmem:[%s3 + $0x2] sm:$0x1]
  %v36 = vld [vmem:[%s3 + $0x3] sm:$0x1]
  %s37 = scalar_lea.vmem %s3, 4
  %v38 = vld [vmem:[%s37] sm:$0x1]
  %v39 = vld [vmem:[%s37 + $0x1] sm:$0x1]
  %v40 = vld [vmem:[%s37 + $0x2] sm:$0x1]
  %v41 = vld [vmem:[%s37 + $0x3] sm:$0x1]
  %s42 = scalar_lea.vmem %s3, 8
  %v43 = vld [vmem:[%s42] sm:$0x1]
  %v44 = vld [vmem:[%s42 + $0x1] sm:$0x1]
  %v45 = vld [vmem:[%s42 + $0x2] sm:$0x1]
  %v46 = vld [vmem:[%s42 + $0x3] sm:$0x1]
  %s47 = scalar_lea.vmem %s3, 12
  %v48 = vld [vmem:[%s47] sm:$0x1]
  %v49 = vld [vmem:[%s47 + $0x1] sm:$0x1]
  %v50 = vld [vmem:[%s47 + $0x2] sm:$0x1]
  %v51 = vld [vmem:[%s47 + $0x3] sm:$0x1]
  %v52 = vld [vmem:[%s1] sm:$0xff]
  %v53 = vld [vmem:[%s1 + $0x8] sm:$0xff]
  %v54 = vld [vmem:[%s1 + $0x10] sm:$0xff]
  %v55 = vld [vmem:[%s1 + $0x18] sm:$0xff]
  %v56 = vld [vmem:[%s1 + $0x20] sm:$0xff]
  %v57 = vld [vmem:[%s1 + $0x28] sm:$0xff]
  %v58 = vld [vmem:[%s1 + $0x30] sm:$0xff]
  %v59 = vld [vmem:[%s1 + $0x38] sm:$0xff]
  %vm60 = vcmask 130048
  %v62 = vsel %vm60, %v17, 0
  %v65 = vsel %vm60, %v18, 0
  %v68 = vsel %vm60, %v19, 0
  %v71 = vsel %vm60, %v20, 0
  %73 = vmatprep.subr.mxu0 0.0
  %74 = vmatpush1.msra.mxu0 0.0
  %75 = vmatprep.subr.mxu0 0.0
  %76 = vmatpush1.msra.mxu0 0.0
  %77 = vmatprep.subr.mxu0 0.0
  %78 = vmatpush1.msra.mxu0 0.0
  %79 = vmatprep.subr.mxu0 0.0
  %80 = vmatpush1.msra.mxu0 0.0
  %81 = vmatprep.subr.mxu0 0.0
  %82 = vmatpush1.msra.mxu0 0.0
  %83 = vmatprep.subr.mxu0 0.0
  %84 = vmatpush1.msra.mxu0 0.0
  %85 = vmatprep.subr.mxu0 0.0
  %86 = vmatpush1.msra.mxu0 0.0
  %87 = vmatprep.subr.mxu0 0.0
  %88 = vmatpush1.msra.mxu0 0.0
  %89 = vmatprep.subr.mxu0 0.0
  %90 = vmatpush1.msra.mxu0 0.0
  %91 = vmatprep.subr.mxu0 0.0
  %92 = vmatpush1.msra.mxu0 0.0
  %93 = vmatprep.subr.mxu0 0.0
  %94 = vmatpush1.msra.mxu0 0.0
  %95 = vmatprep.subr.mxu0 0.0
  %96 = vmatpush1.msra.mxu0 0.0
  %97 = vmatprep.subr.mxu0 0.0
  %98 = vmatpush1.msra.mxu0 0.0
  %99 = vmatprep.subr.mxu0 0.0
  %100 = vmatpush1.msra.mxu0 0.0
  %101 = vmatprep.subr.mxu0 0.0
  %102 = vmatpush1.msra.mxu0 %v53
  %103 = vmatprep.subr.mxu0 0.0
  %104 = vmatpush1.msra.mxu0 %v52
  %105 = vmatprep.subr.mxu0 0.0
  %106 = vmatpush2.msra.mxu0 0.0
  %107 = vmatprep.subr.mxu0 0.0
  %108 = vmatpush2.msra.mxu0 0.0
  %109 = vmatprep.subr.mxu0 0.0
  %110 = vmatpush2.msra.mxu0 0.0
  %111 = vmatprep.subr.mxu0 0.0
  %112 = vmatpush2.msra.mxu0 0.0
  %113 = vmatprep.subr.mxu0 0.0
  %114 = vmatpush2.msra.mxu0 0.0
  %115 = vmatprep.subr.mxu0 0.0
  %116 = vmatpush2.msra.mxu0 0.0
  %117 = vmatprep.subr.mxu0 0.0
  %118 = vmatpush2.msra.mxu0 0.0
  %119 = vmatprep.subr.mxu0 0.0
  %120 = vmatpush2.msra.mxu0 0.0
  %121 = vmatprep.subr.mxu0 0.0
  %122 = vmatpush2.msra.mxu0 0.0
  %123 = vmatprep.subr.mxu0 0.0
  %124 = vmatpush2.msra.mxu0 0.0
  %125 = vmatprep.subr.mxu0 0.0
  %126 = vmatpush2.msra.mxu0 0.0
  %127 = vmatprep.subr.mxu0 0.0
  %128 = vmatpush2.msra.mxu0 0.0
  %129 = vmatprep.subr.mxu0 0.0
  %130 = vmatpush2.msra.mxu0 0.0
  %131 = vmatprep.subr.mxu0 0.0
  %132 = vmatpush2.msra.mxu0 0.0
  %133 = vmatprep.subr.mxu0 0.0
  %134 = vmatpush2.msra.mxu0 0.0
  %135 = vmatprep.subr.mxu0 0.0
  %136 = vmatpush2.msra.mxu0 0.0
  %137 = vmatprep.mubr.f32.mxu0 0.0
  %138 = vmatmul.mubr.f32.gmra.mxu0 %v62
  %v139 = vpop.f32.mrf.mxu0
  %v140 = vadd.f32 0.0, %v139
  %v141 = vpop.f32.mrf.mxu0
  %142 = vmatprep.mubr.f32.mxu0 0.0
  %143 = vmatmul.mubr.f32.gmra.mxu0 %v65
  %v144 = vpop.f32.mrf.mxu0
  %v145 = vadd.f32 0.0, %v144
  %v146 = vpop.f32.mrf.mxu0
  %147 = vmatprep.mubr.f32.mxu0 0.0
  %148 = vmatmul.mubr.f32.gmra.mxu0 %v68
  %v149 = vpop.f32.mrf.mxu0
  %v150 = vadd.f32 0.0, %v149
  %v151 = vpop.f32.mrf.mxu0
  %152 = vmatprep.mubr.f32.mxu0 0.0
  %153 = vmatmul.mubr.f32.gmra.mxu0 %v71
  %v154 = vpop.f32.mrf.mxu0
  %v155 = vadd.f32 0.0, %v154
  %v156 = vpop.f32.mrf.mxu0
  %157 = vdwg.mxu0
  %v159 = vsel %vm60, %v21, 0
  %v162 = vsel %vm60, %v22, 0
  %v165 = vsel %vm60, %v23, 0
  %v168 = vsel %vm60, %v24, 0
  %170 = vmatprep.subr.mxu0 0.0
  %171 = vmatpush1.msra.mxu0 0.0
  %172 = vmatprep.subr.mxu0 0.0
  %173 = vmatpush1.msra.mxu0 0.0
  %174 = vmatprep.subr.mxu0 0.0
  %175 = vmatpush1.msra.mxu0 0.0
  %176 = vmatprep.subr.mxu0 0.0
  %177 = vmatpush1.msra.mxu0 0.0
  %178 = vmatprep.subr.mxu0 0.0
  %179 = vmatpush1.msra.mxu0 0.0
  %180 = vmatprep.subr.mxu0 0.0
  %181 = vmatpush1.msra.mxu0 0.0
  %182 = vmatprep.subr.mxu0 0.0
  %183 = vmatpush1.msra.mxu0 0.0
  %184 = vmatprep.subr.mxu0 0.0
  %185 = vmatpush1.msra.mxu0 0.0
  %186 = vmatprep.subr.mxu0 0.0
  %187 = vmatpush1.msra.mxu0 0.0
  %188 = vmatprep.subr.mxu0 0.0
  %189 = vmatpush1.msra.mxu0 0.0
  %190 = vmatprep.subr.mxu0 0.0
  %191 = vmatpush1.msra.mxu0 0.0
  %192 = vmatprep.subr.mxu0 0.0
  %193 = vmatpush1.msra.mxu0 0.0
  %194 = vmatprep.subr.mxu0 0.0
  %195 = vmatpush1.msra.mxu0 0.0
  %196 = vmatprep.subr.mxu0 0.0
  %197 = vmatpush1.msra.mxu0 0.0
  %198 = vmatprep.subr.mxu0 0.0
  %199 = vmatpush1.msra.mxu0 %v55
  %200 = vmatprep.subr.mxu0 0.0
  %201 = vmatpush1.msra.mxu0 %v54
  %202 = vmatprep.subr.mxu0 0.0
  %203 = vmatpush2.msra.mxu0 0.0
  %204 = vmatprep.subr.mxu0 0.0
  %205 = vmatpush2.msra.mxu0 0.0
  %206 = vmatprep.subr.mxu0 0.0
  %207 = vmatpush2.msra.mxu0 0.0
  %208 = vmatprep.subr.mxu0 0.0
  %209 = vmatpush2.msra.mxu0 0.0
  %210 = vmatprep.subr.mxu0 0.0
  %211 = vmatpush2.msra.mxu0 0.0
  %212 = vmatprep.subr.mxu0 0.0
  %213 = vmatpush2.msra.mxu0 0.0
  %214 = vmatprep.subr.mxu0 0.0
  %215 = vmatpush2.msra.mxu0 0.0
  %216 = vmatprep.subr.mxu0 0.0
  %217 = vmatpush2.msra.mxu0 0.0
  %218 = vmatprep.subr.mxu0 0.0
  %219 = vmatpush2.msra.mxu0 0.0
  %220 = vmatprep.subr.mxu0 0.0
  %221 = vmatpush2.msra.mxu0 0.0
  %222 = vmatprep.subr.mxu0 0.0
  %223 = vmatpush2.msra.mxu0 0.0
  %224 = vmatprep.subr.mxu0 0.0
  %225 = vmatpush2.msra.mxu0 0.0
  %226 = vmatprep.subr.mxu0 0.0
  %227 = vmatpush2.msra.mxu0 0.0
  %228 = vmatprep.subr.mxu0 0.0
  %229 = vmatpush2.msra.mxu0 0.0
  %230 = vmatprep.subr.mxu0 0.0
  %231 = vmatpush2.msra.mxu0 0.0
  %232 = vmatprep.subr.mxu0 0.0
  %233 = vmatpush2.msra.mxu0 0.0
  %234 = vmatprep.mubr.f32.mxu0 0.0
  %235 = vmatmul.mubr.f32.gmra.mxu0 %v159
  %v236 = vpop.f32.mrf.mxu0
  %v237 = vadd.f32 0.0, %v236
  %v238 = vpop.f32.mrf.mxu0
  %239 = vmatprep.mubr.f32.mxu0 0.0
  %240 = vmatmul.mubr.f32.gmra.mxu0 %v162
  %v241 = vpop.f32.mrf.mxu0
  %v242 = vadd.f32 0.0, %v241
  %v243 = vpop.f32.mrf.mxu0
  %244 = vmatprep.mubr.f32.mxu0 0.0
  %245 = vmatmul.mubr.f32.gmra.mxu0 %v165
  %v246 = vpop.f32.mrf.mxu0
  %v247 = vadd.f32 0.0, %v246
  %v248 = vpop.f32.mrf.mxu0
  %249 = vmatprep.mubr.f32.mxu0 0.0
  %250 = vmatmul.mubr.f32.gmra.mxu0 %v168
  %v251 = vpop.f32.mrf.mxu0
  %v252 = vadd.f32 0.0, %v251
  %v253 = vpop.f32.mrf.mxu0
  %254 = vdwg.mxu0
  %v256 = vsel %vm60, %v25, 0
  %v259 = vsel %vm60, %v26, 0
  %v262 = vsel %vm60, %v27, 0
  %v265 = vsel %vm60, %v28, 0
  %267 = vmatprep.subr.mxu0 0.0
  %268 = vmatpush1.msra.mxu0 0.0
  %269 = vmatprep.subr.mxu0 0.0
  %270 = vmatpush1.msra.mxu0 0.0
  %271 = vmatprep.subr.mxu0 0.0
  %272 = vmatpush1.msra.mxu0 0.0
  %273 = vmatprep.subr.mxu0 0.0
  %274 = vmatpush1.msra.mxu0 0.0
  %275 = vmatprep.subr.mxu0 0.0
  %276 = vmatpush1.msra.mxu0 0.0
  %277 = vmatprep.subr.mxu0 0.0
  %278 = vmatpush1.msra.mxu0 0.0
  %279 = vmatprep.subr.mxu0 0.0
  %280 = vmatpush1.msra.mxu0 0.0
  %281 = vmatprep.subr.mxu0 0.0
  %282 = vmatpush1.msra.mxu0 0.0
  %283 = vmatprep.subr.mxu0 0.0
  %284 = vmatpush1.msra.mxu0 0.0
  %285 = vmatprep.subr.mxu0 0.0
  %286 = vmatpush1.msra.mxu0 0.0
  %287 = vmatprep.subr.mxu0 0.0
  %288 = vmatpush1.msra.mxu0 0.0
  %289 = vmatprep.subr.mxu0 0.0
  %290 = vmatpush1.msra.mxu0 0.0
  %291 = vmatprep.subr.mxu0 0.0
  %292 = vmatpush1.msra.mxu0 0.0
  %293 = vmatprep.subr.mxu0 0.0
  %294 = vmatpush1.msra.mxu0 0.0
  %295 = vmatprep.subr.mxu0 0.0
  %296 = vmatpush1.msra.mxu0 %v57
  %297 = vmatprep.subr.mxu0 0.0
  %298 = vmatpush1.msra.mxu0 %v56
  %299 = vmatprep.subr.mxu0 0.0
  %300 = vmatpush2.msra.mxu0 0.0
  %301 = vmatprep.subr.mxu0 0.0
  %302 = vmatpush2.msra.mxu0 0.0
  %303 = vmatprep.subr.mxu0 0.0
  %304 = vmatpush2.msra.mxu0 0.0
  %305 = vmatprep.subr.mxu0 0.0
  %306 = vmatpush2.msra.mxu0 0.0
  %307 = vmatprep.subr.mxu0 0.0
  %308 = vmatpush2.msra.mxu0 0.0
  %309 = vmatprep.subr.mxu0 0.0
  %310 = vmatpush2.msra.mxu0 0.0
  %311 = vmatprep.subr.mxu0 0.0
  %312 = vmatpush2.msra.mxu0 0.0
  %313 = vmatprep.subr.mxu0 0.0
  %314 = vmatpush2.msra.mxu0 0.0
  %315 = vmatprep.subr.mxu0 0.0
  %316 = vmatpush2.msra.mxu0 0.0
  %317 = vmatprep.subr.mxu0 0.0
  %318 = vmatpush2.msra.mxu0 0.0
  %319 = vmatprep.subr.mxu0 0.0
  %320 = vmatpush2.msra.mxu0 0.0
  %321 = vmatprep.subr.mxu0 0.0
  %322 = vmatpush2.msra.mxu0 0.0
  %323 = vmatprep.subr.mxu0 0.0
  %324 = vmatpush2.msra.mxu0 0.0
  %325 = vmatprep.subr.mxu0 0.0
  %326 = vmatpush2.msra.mxu0 0.0
  %327 = vmatprep.subr.mxu0 0.0
  %328 = vmatpush2.msra.mxu0 0.0
  %329 = vmatprep.subr.mxu0 0.0
  %330 = vmatpush2.msra.mxu0 0.0
  %331 = vmatprep.mubr.f32.mxu0 0.0
  %332 = vmatmul.mubr.f32.gmra.mxu0 %v256
  %v333 = vpop.f32.mrf.mxu0
  %v334 = vadd.f32 0.0, %v333
  %v335 = vpop.f32.mrf.mxu0
  %336 = vmatprep.mubr.f32.mxu0 0.0
  %337 = vmatmul.mubr.f32.gmra.mxu0 %v259
  %v338 = vpop.f32.mrf.mxu0
  %v339 = vadd.f32 0.0, %v338
  %v340 = vpop.f32.mrf.mxu0
  %341 = vmatprep.mubr.f32.mxu0 0.0
  %342 = vmatmul.mubr.f32.gmra.mxu0 %v262
  %v343 = vpop.f32.mrf.mxu0
  %v344 = vadd.f32 0.0, %v343
  %v345 = vpop.f32.mrf.mxu0
  %346 = vmatprep.mubr.f32.mxu0 0.0
  %347 = vmatmul.mubr.f32.gmra.mxu0 %v265
  %v348 = vpop.f32.mrf.mxu0
  %v349 = vadd.f32 0.0, %v348
  %v350 = vpop.f32.mrf.mxu0
  %351 = vdwg.mxu0
  %v353 = vsel %vm60, %v29, 0
  %v356 = vsel %vm60, %v30, 0
  %v359 = vsel %vm60, %v31, 0
  %v362 = vsel %vm60, %v32, 0
  %364 = vmatprep.subr.mxu0 0.0
  %365 = vmatpush1.msra.mxu0 0.0
  %366 = vmatprep.subr.mxu0 0.0
  %367 = vmatpush1.msra.mxu0 0.0
  %368 = vmatprep.subr.mxu0 0.0
  %369 = vmatpush1.msra.mxu0 0.0
  %370 = vmatprep.subr.mxu0 0.0
  %371 = vmatpush1.msra.mxu0 0.0
  %372 = vmatprep.subr.mxu0 0.0
  %373 = vmatpush1.msra.mxu0 0.0
  %374 = vmatprep.subr.mxu0 0.0
  %375 = vmatpush1.msra.mxu0 0.0
  %376 = vmatprep.subr.mxu0 0.0
  %377 = vmatpush1.msra.mxu0 0.0
  %378 = vmatprep.subr.mxu0 0.0
  %379 = vmatpush1.msra.mxu0 0.0
  %380 = vmatprep.subr.mxu0 0.0
  %381 = vmatpush1.msra.mxu0 0.0
  %382 = vmatprep.subr.mxu0 0.0
  %383 = vmatpush1.msra.mxu0 0.0
  %384 = vmatprep.subr.mxu0 0.0
  %385 = vmatpush1.msra.mxu0 0.0
  %386 = vmatprep.subr.mxu0 0.0
  %387 = vmatpush1.msra.mxu0 0.0
  %388 = vmatprep.subr.mxu0 0.0
  %389 = vmatpush1.msra.mxu0 0.0
  %390 = vmatprep.subr.mxu0 0.0
  %391 = vmatpush1.msra.mxu0 0.0
  %392 = vmatprep.subr.mxu0 0.0
  %393 = vmatpush1.msra.mxu0 %v59
  %394 = vmatprep.subr.mxu0 0.0
  %395 = vmatpush1.msra.mxu0 %v58
  %396 = vmatprep.subr.mxu0 0.0
  %397 = vmatpush2.msra.mxu0 0.0
  %398 = vmatprep.subr.mxu0 0.0
  %399 = vmatpush2.msra.mxu0 0.0
  %400 = vmatprep.subr.mxu0 0.0
  %401 = vmatpush2.msra.mxu0 0.0
  %402 = vmatprep.subr.mxu0 0.0
  %403 = vmatpush2.msra.mxu0 0.0
  %404 = vmatprep.subr.mxu0 0.0
  %405 = vmatpush2.msra.mxu0 0.0
  %406 = vmatprep.subr.mxu0 0.0
  %407 = vmatpush2.msra.mxu0 0.0
  %408 = vmatprep.subr.mxu0 0.0
  %409 = vmatpush2.msra.mxu0 0.0
  %410 = vmatprep.subr.mxu0 0.0
  %411 = vmatpush2.msra.mxu0 0.0
  %412 = vmatprep.subr.mxu0 0.0
  %413 = vmatpush2.msra.mxu0 0.0
  %414 = vmatprep.subr.mxu0 0.0
  %415 = vmatpush2.msra.mxu0 0.0
  %416 = vmatprep.subr.mxu0 0.0
  %417 = vmatpush2.msra.mxu0 0.0
  %418 = vmatprep.subr.mxu0 0.0
  %419 = vmatpush2.msra.mxu0 0.0
  %420 = vmatprep.subr.mxu0 0.0
  %421 = vmatpush2.msra.mxu0 0.0
  %422 = vmatprep.subr.mxu0 0.0
  %423 = vmatpush2.msra.mxu0 0.0
  %424 = vmatprep.subr.mxu0 0.0
  %425 = vmatpush2.msra.mxu0 0.0
  %426 = vmatprep.subr.mxu0 0.0
  %427 = vmatpush2.msra.mxu0 0.0
  %428 = vmatprep.mubr.f32.mxu0 0.0
  %429 = vmatmul.mubr.f32.gmra.mxu0 %v353
  %v430 = vpop.f32.mrf.mxu0
  %v431 = vadd.f32 0.0, %v430
  %v432 = vpop.f32.mrf.mxu0
  %433 = vmatprep.mubr.f32.mxu0 0.0
  %434 = vmatmul.mubr.f32.gmra.mxu0 %v356
  %v435 = vpop.f32.mrf.mxu0
  %v436 = vadd.f32 0.0, %v435
  %v437 = vpop.f32.mrf.mxu0
  %438 = vmatprep.mubr.f32.mxu0 0.0
  %439 = vmatmul.mubr.f32.gmra.mxu0 %v359
  %v440 = vpop.f32.mrf.mxu0
  %v441 = vadd.f32 0.0, %v440
  %v442 = vpop.f32.mrf.mxu0
  %443 = vmatprep.mubr.f32.mxu0 0.0
  %444 = vmatmul.mubr.f32.gmra.mxu0 %v362
  %v445 = vpop.f32.mrf.mxu0
  %v446 = vadd.f32 0.0, %v445
  %v447 = vpop.f32.mrf.mxu0
  %448 = vdwg.mxu0
  %v449 = vsel %vm60, %v140, 0.0
  %450 = vadd.xlane.f32.xlu0 %v449
  %v451 = vpop.xlane.xlu0 %450
  %v452 = vsel %vm60, %v145, 0.0
  %453 = vadd.xlane.f32.xlu0 %v452
  %v454 = vpop.xlane.xlu0 %453
  %v455 = vsel %vm60, %v150, 0.0
  %456 = vadd.xlane.f32.xlu0 %v455
  %v457 = vpop.xlane.xlu0 %456
  %v458 = vsel %vm60, %v155, 0.0
  %459 = vadd.xlane.f32.xlu0 %v458
  %v460 = vpop.xlane.xlu0 %459
  %v461 = vsel %vm60, %v237, 0.0
  %462 = vadd.xlane.f32.xlu0 %v461
  %v463 = vpop.xlane.xlu0 %462
  %v464 = vsel %vm60, %v242, 0.0
  %465 = vadd.xlane.f32.xlu0 %v464
  %v466 = vpop.xlane.xlu0 %465
  %v467 = vsel %vm60, %v247, 0.0
  %468 = vadd.xlane.f32.xlu0 %v467
  %v469 = vpop.xlane.xlu0 %468
  %v470 = vsel %vm60, %v252, 0.0
  %471 = vadd.xlane.f32.xlu0 %v470
  %v472 = vpop.xlane.xlu0 %471
  %v473 = vsel %vm60, %v334, 0.0
  %474 = vadd.xlane.f32.xlu0 %v473
  %v475 = vpop.xlane.xlu0 %474
  %v476 = vsel %vm60, %v339, 0.0
  %477 = vadd.xlane.f32.xlu0 %v476
  %v478 = vpop.xlane.xlu0 %477
  %v479 = vsel %vm60, %v344, 0.0
  %480 = vadd.xlane.f32.xlu0 %v479
  %v481 = vpop.xlane.xlu0 %480
  %v482 = vsel %vm60, %v349, 0.0
  %483 = vadd.xlane.f32.xlu0 %v482
  %v484 = vpop.xlane.xlu0 %483
  %v485 = vsel %vm60, %v431, 0.0
  %486 = vadd.xlane.f32.xlu0 %v485
  %v487 = vpop.xlane.xlu0 %486
  %v488 = vsel %vm60, %v436, 0.0
  %489 = vadd.xlane.f32.xlu0 %v488
  %v490 = vpop.xlane.xlu0 %489
  %v491 = vsel %vm60, %v441, 0.0
  %492 = vadd.xlane.f32.xlu0 %v491
  %v493 = vpop.xlane.xlu0 %492
  %v494 = vsel %vm60, %v446, 0.0
  %495 = vadd.xlane.f32.xlu0 %v494
  %v496 = vpop.xlane.xlu0 %495
  %v497 = vadd.f32 %v451, %v454
  %v498 = vadd.f32 %v497, %v457
  %v499 = vadd.f32 %v498, %v460
  %v500 = vrot.slane %v499, 4
  %v501 = vadd.f32 %v499, %v500
  %v502 = vrot.slane %v501, 2
  %v503 = vadd.f32 %v501, %v502
  %v504 = vrot.slane %v503, 1
  %v505 = vadd.f32 %v503, %v504
  %v506 = vadd.f32 %v463, %v466
  %v507 = vadd.f32 %v506, %v469
  %v508 = vadd.f32 %v507, %v472
  %v509 = vrot.slane %v508, 4
  %v510 = vadd.f32 %v508, %v509
  %v511 = vrot.slane %v510, 2
  %v512 = vadd.f32 %v510, %v511
  %v513 = vrot.slane %v512, 1
  %v514 = vadd.f32 %v512, %v513
  %v515 = vadd.f32 %v475, %v478
  %v516 = vadd.f32 %v515, %v481
  %v517 = vadd.f32 %v516, %v484
  %v518 = vrot.slane %v517, 4
  %v519 = vadd.f32 %v517, %v518
  %v520 = vrot.slane %v519, 2
  %v521 = vadd.f32 %v519, %v520
  %v522 = vrot.slane %v521, 1
  %v523 = vadd.f32 %v521, %v522
  %v524 = vadd.f32 %v487, %v490
  %v525 = vadd.f32 %v524, %v493
  %v526 = vadd.f32 %v525, %v496
  %v527 = vrot.slane %v526, 4
  %v528 = vadd.f32 %v526, %v527
  %v529 = vrot.slane %v528, 2
  %v530 = vadd.f32 %v528, %v529
  %v531 = vrot.slane %v530, 1
  %v532 = vadd.f32 %v530, %v531
  %v533 = vmul.f32 %v505, 0.001953125
  %v534 = vmul.f32 %v514, 0.001953125
  %v535 = vmul.f32 %v523, 0.001953125
  %v536 = vmul.f32 %v532, 0.001953125
  %v537 = vsub.f32 %v140, %v533
  %v538 = vsub.f32 %v145, %v533
  %v539 = vsub.f32 %v150, %v533
  %v540 = vsub.f32 %v155, %v533
  %v541 = vsub.f32 %v237, %v534
  %v542 = vsub.f32 %v242, %v534
  %v543 = vsub.f32 %v247, %v534
  %v544 = vsub.f32 %v252, %v534
  %v545 = vsub.f32 %v334, %v535
  %v546 = vsub.f32 %v339, %v535
  %v547 = vsub.f32 %v344, %v535
  %v548 = vsub.f32 %v349, %v535
  %v549 = vsub.f32 %v431, %v536
  %v550 = vsub.f32 %v436, %v536
  %v551 = vsub.f32 %v441, %v536
  %v552 = vsub.f32 %v446, %v536
  %v553 = vmul.f32 %v537, %v537
  %v554 = vmul.f32 %v538, %v538
  %v555 = vmul.f32 %v539, %v539
  %v556 = vmul.f32 %v540, %v540
  %v557 = vmul.f32 %v541, %v541
  %v558 = vmul.f32 %v542, %v542
  %v559 = vmul.f32 %v543, %v543
  %v560 = vmul.f32 %v544, %v544
  %v561 = vmul.f32 %v545, %v545
  %v562 = vmul.f32 %v546, %v546
  %v563 = vmul.f32 %v547, %v547
  %v564 = vmul.f32 %v548, %v548
  %v565 = vmul.f32 %v549, %v549
  %v566 = vmul.f32 %v550, %v550
  %v567 = vmul.f32 %v551, %v551
  %v568 = vmul.f32 %v552, %v552
  %v569 = vsel %vm60, %v553, 0.0
  %570 = vadd.xlane.f32.xlu0 %v569
  %v571 = vpop.xlane.xlu0 %570
  %v572 = vsel %vm60, %v554, 0.0
  %573 = vadd.xlane.f32.xlu0 %v572
  %v574 = vpop.xlane.xlu0 %573
  %v575 = vsel %vm60, %v555, 0.0
  %576 = vadd.xlane.f32.xlu0 %v575
  %v577 = vpop.xlane.xlu0 %576
  %v578 = vsel %vm60, %v556, 0.0
  %579 = vadd.xlane.f32.xlu0 %v578
  %v580 = vpop.xlane.xlu0 %579
  %v581 = vsel %vm60, %v557, 0.0
  %582 = vadd.xlane.f32.xlu0 %v581
  %v583 = vpop.xlane.xlu0 %582
  %v584 = vsel %vm60, %v558, 0.0
  %585 = vadd.xlane.f32.xlu0 %v584
  %v586 = vpop.xlane.xlu0 %585
  %v587 = vsel %vm60, %v559, 0.0
  %588 = vadd.xlane.f32.xlu0 %v587
  %v589 = vpop.xlane.xlu0 %588
  %v590 = vsel %vm60, %v560, 0.0
  %591 = vadd.xlane.f32.xlu0 %v590
  %v592 = vpop.xlane.xlu0 %591
  %v593 = vsel %vm60, %v561, 0.0
  %594 = vadd.xlane.f32.xlu0 %v593
  %v595 = vpop.xlane.xlu0 %594
  %v596 = vsel %vm60, %v562, 0.0
  %597 = vadd.xlane.f32.xlu0 %v596
  %v598 = vpop.xlane.xlu0 %597
  %v599 = vsel %vm60, %v563, 0.0
  %600 = vadd.xlane.f32.xlu0 %v599
  %v601 = vpop.xlane.xlu0 %600
  %v602 = vsel %vm60, %v564, 0.0
  %603 = vadd.xlane.f32.xlu0 %v602
  %v604 = vpop.xlane.xlu0 %603
  %v605 = vsel %vm60, %v565, 0.0
  %606 = vadd.xlane.f32.xlu0 %v605
  %v607 = vpop.xlane.xlu0 %606
  %v608 = vsel %vm60, %v566, 0.0
  %609 = vadd.xlane.f32.xlu0 %v608
  %v610 = vpop.xlane.xlu0 %609
  %v611 = vsel %vm60, %v567, 0.0
  %612 = vadd.xlane.f32.xlu0 %v611
  %v613 = vpop.xlane.xlu0 %612
  %v614 = vsel %vm60, %v568, 0.0
  %615 = vadd.xlane.f32.xlu0 %v614
  %v616 = vpop.xlane.xlu0 %615
  %v617 = vadd.f32 %v571, %v574
  %v618 = vadd.f32 %v617, %v577
  %v619 = vadd.f32 %v618, %v580
  %v620 = vrot.slane %v619, 4
  %v621 = vadd.f32 %v619, %v620
  %v622 = vrot.slane %v621, 2
  %v623 = vadd.f32 %v621, %v622
  %v624 = vrot.slane %v623, 1
  %v625 = vadd.f32 %v623, %v624
  %v626 = vadd.f32 %v583, %v586
  %v627 = vadd.f32 %v626, %v589
  %v628 = vadd.f32 %v627, %v592
  %v629 = vrot.slane %v628, 4
  %v630 = vadd.f32 %v628, %v629
  %v631 = vrot.slane %v630, 2
  %v632 = vadd.f32 %v630, %v631
  %v633 = vrot.slane %v632, 1
  %v634 = vadd.f32 %v632, %v633
  %v635 = vadd.f32 %v595, %v598
  %v636 = vadd.f32 %v635, %v601
  %v637 = vadd.f32 %v636, %v604
  %v638 = vrot.slane %v637, 4
  %v639 = vadd.f32 %v637, %v638
  %v640 = vrot.slane %v639, 2
  %v641 = vadd.f32 %v639, %v640
  %v642 = vrot.slane %v641, 1
  %v643 = vadd.f32 %v641, %v642
  %v644 = vadd.f32 %v607, %v610
  %v645 = vadd.f32 %v644, %v613
  %v646 = vadd.f32 %v645, %v616
  %v647 = vrot.slane %v646, 4
  %v648 = vadd.f32 %v646, %v647
  %v649 = vrot.slane %v648, 2
  %v650 = vadd.f32 %v648, %v649
  %v651 = vrot.slane %v650, 1
  %v652 = vadd.f32 %v650, %v651
  %v653 = vmul.f32 %v625, 0.001953125
  %v654 = vmul.f32 %v634, 0.001953125
  %v655 = vmul.f32 %v643, 0.001953125
  %v656 = vmul.f32 %v652, 0.001953125
  %v657 = vadd.f32 %v653, 1e-05
  %v658 = vadd.f32 %v654, 1e-05
  %v659 = vadd.f32 %v655, 1e-05
  %v660 = vadd.f32 %v656, 1e-05
  %v661 = vrsqrt.pop %v657
  %v662 = vrsqrt.pop %v658
  %v663 = vrsqrt.pop %v659
  %v664 = vrsqrt.pop %v660
  %v665 = vmul.f32 %v33, %v661
  %v666 = vmul.f32 %v34, %v662
  %v667 = vmul.f32 %v35, %v663
  %v668 = vmul.f32 %v36, %v664
  %v673 = vlaneseq
  %v674 = vshrl.u32 %v673, 7
  %v675 = vsub.s32 0, %v674
  %v676 = vrot.slane %v665, %v675
  %v677 = vlaneseq
  %v678 = vshrl.u32 %v677, 7
  %v679 = vsub.s32 0, %v678
  %v680 = vrot.slane %v666, %v679
  %v681 = vlaneseq
  %v682 = vshrl.u32 %v681, 7
  %v683 = vsub.s32 0, %v682
  %v684 = vrot.slane %v667, %v683
  %v685 = vlaneseq
  %v686 = vshrl.u32 %v685, 7
  %v687 = vsub.s32 0, %v686
  %v688 = vrot.slane %v668, %v687
  %689 = vset.pattern.permute.xlu0 0
  %690 = vperm.xlu0 %689, %v676
  %v691 = vpop.permute.xlu0 %690
  %693 = vset.pattern.permute.xlu0 0
  %694 = vperm.xlu0 %693, %v680
  %v695 = vpop.permute.xlu0 %694
  %697 = vset.pattern.permute.xlu0 0
  %698 = vperm.xlu0 %697, %v684
  %v699 = vpop.permute.xlu0 %698
  %701 = vset.pattern.permute.xlu0 0
  %702 = vperm.xlu0 %701, %v688
  %v703 = vpop.permute.xlu0 %702
  %v705 = vmul.f32 %v537, %v691
  %v706 = vmul.f32 %v538, %v691
  %v707 = vmul.f32 %v539, %v691
  %v708 = vmul.f32 %v540, %v691
  %v709 = vmul.f32 %v541, %v695
  %v710 = vmul.f32 %v542, %v695
  %v711 = vmul.f32 %v543, %v695
  %v712 = vmul.f32 %v544, %v695
  %v713 = vmul.f32 %v545, %v699
  %v714 = vmul.f32 %v546, %v699
  %v715 = vmul.f32 %v547, %v699
  %v716 = vmul.f32 %v548, %v699
  %v717 = vmul.f32 %v549, %v703
  %v718 = vmul.f32 %v550, %v703
  %v719 = vmul.f32 %v551, %v703
  %v720 = vmul.f32 %v552, %v703
  %v725 = vlaneseq
  %v726 = vshrl.u32 %v725, 7
  %v727 = vsub.s32 0, %v726
  %v728 = vrot.slane %v38, %v727
  %v729 = vlaneseq
  %v730 = vshrl.u32 %v729, 7
  %v731 = vsub.s32 0, %v730
  %v732 = vrot.slane %v39, %v731
  %v733 = vlaneseq
  %v734 = vshrl.u32 %v733, 7
  %v735 = vsub.s32 0, %v734
  %v736 = vrot.slane %v40, %v735
  %v737 = vlaneseq
  %v738 = vshrl.u32 %v737, 7
  %v739 = vsub.s32 0, %v738
  %v740 = vrot.slane %v41, %v739
  %741 = vset.pattern.permute.xlu0 0
  %742 = vperm.xlu0 %741, %v728
  %v743 = vpop.permute.xlu0 %742
  %745 = vset.pattern.permute.xlu0 0
  %746 = vperm.xlu0 %745, %v732
  %v747 = vpop.permute.xlu0 %746
  %749 = vset.pattern.permute.xlu0 0
  %750 = vperm.xlu0 %749, %v736
  %v751 = vpop.permute.xlu0 %750
  %753 = vset.pattern.permute.xlu0 0
  %754 = vperm.xlu0 %753, %v740
  %v755 = vpop.permute.xlu0 %754
  %v757 = vadd.f32 %v705, %v743
  %v758 = vadd.f32 %v706, %v743
  %v759 = vadd.f32 %v707, %v743
  %v760 = vadd.f32 %v708, %v743
  %v761 = vadd.f32 %v709, %v747
  %v762 = vadd.f32 %v710, %v747
  %v763 = vadd.f32 %v711, %v747
  %v764 = vadd.f32 %v712, %v747
  %v765 = vadd.f32 %v713, %v751
  %v766 = vadd.f32 %v714, %v751
  %v767 = vadd.f32 %v715, %v751
  %v768 = vadd.f32 %v716, %v751
  %v769 = vadd.f32 %v717, %v755
  %v770 = vadd.f32 %v718, %v755
  %v771 = vadd.f32 %v719, %v755
  %v772 = vadd.f32 %v720, %v755
  %v773 = vld [vmem:[%s2] sm:$0xff]
  %v774 = vld [vmem:[%s2 + $0x8] sm:$0xff]
  %v775 = vld [vmem:[%s2 + $0x10] sm:$0xff]
  %v776 = vld [vmem:[%s2 + $0x18] sm:$0xff]
  %v777 = vld [vmem:[%s2 + $0x20] sm:$0xff]
  %v778 = vld [vmem:[%s2 + $0x28] sm:$0xff]
  %v779 = vld [vmem:[%s2 + $0x30] sm:$0xff]
  %v780 = vld [vmem:[%s2 + $0x38] sm:$0xff]
  %v781 = vld [vmem:[%s2 + $0x40] sm:$0xff]
  %v782 = vld [vmem:[%s2 + $0x48] sm:$0xff]
  %v783 = vld [vmem:[%s2 + $0x50] sm:$0xff]
  %v784 = vld [vmem:[%s2 + $0x58] sm:$0xff]
  %v785 = vld [vmem:[%s2 + $0x60] sm:$0xff]
  %v786 = vld [vmem:[%s2 + $0x68] sm:$0xff]
  %v787 = vld [vmem:[%s2 + $0x70] sm:$0xff]
  %v788 = vld [vmem:[%s2 + $0x78] sm:$0xff]
  %vm789 = vcmask 261120
  %v791 = vsel %vm789, %v773, 0
  %v794 = vsel %vm789, %v774, 0
  %v797 = vsel %vm789, %v775, 0
  %v800 = vsel %vm789, %v776, 0
  %802 = vmatprep.subr.mxu0 0.0
  %803 = vmatpush1.msra.mxu0 0.0
  %804 = vmatprep.subr.mxu0 0.0
  %805 = vmatpush1.msra.mxu0 0.0
  %806 = vmatprep.subr.mxu0 0.0
  %807 = vmatpush1.msra.mxu0 0.0
  %808 = vmatprep.subr.mxu0 0.0
  %809 = vmatpush1.msra.mxu0 0.0
  %810 = vmatprep.subr.mxu0 0.0
  %811 = vmatpush1.msra.mxu0 0.0
  %812 = vmatprep.subr.mxu0 0.0
  %813 = vmatpush1.msra.mxu0 0.0
  %814 = vmatprep.subr.mxu0 0.0
  %815 = vmatpush1.msra.mxu0 0.0
  %816 = vmatprep.subr.mxu0 0.0
  %817 = vmatpush1.msra.mxu0 0.0
  %818 = vmatprep.subr.mxu0 0.0
  %819 = vmatpush1.msra.mxu0 0.0
  %820 = vmatprep.subr.mxu0 0.0
  %821 = vmatpush1.msra.mxu0 0.0
  %822 = vmatprep.subr.mxu0 0.0
  %823 = vmatpush1.msra.mxu0 0.0
  %824 = vmatprep.subr.mxu0 0.0
  %825 = vmatpush1.msra.mxu0 0.0
  %826 = vmatprep.subr.mxu0 0.0
  %827 = vmatpush1.msra.mxu0 %v760
  %828 = vmatprep.subr.mxu0 0.0
  %829 = vmatpush1.msra.mxu0 %v759
  %830 = vmatprep.subr.mxu0 0.0
  %831 = vmatpush1.msra.mxu0 %v758
  %832 = vmatprep.subr.mxu0 0.0
  %833 = vmatpush1.msra.mxu0 %v757
  %834 = vmatprep.subr.mxu0 0.0
  %835 = vmatpush2.msra.mxu0 0.0
  %836 = vmatprep.subr.mxu0 0.0
  %837 = vmatpush2.msra.mxu0 0.0
  %838 = vmatprep.subr.mxu0 0.0
  %839 = vmatpush2.msra.mxu0 0.0
  %840 = vmatprep.subr.mxu0 0.0
  %841 = vmatpush2.msra.mxu0 0.0
  %842 = vmatprep.subr.mxu0 0.0
  %843 = vmatpush2.msra.mxu0 0.0
  %844 = vmatprep.subr.mxu0 0.0
  %845 = vmatpush2.msra.mxu0 0.0
  %846 = vmatprep.subr.mxu0 0.0
  %847 = vmatpush2.msra.mxu0 0.0
  %848 = vmatprep.subr.mxu0 0.0
  %849 = vmatpush2.msra.mxu0 0.0
  %850 = vmatprep.subr.mxu0 0.0
  %851 = vmatpush2.msra.mxu0 0.0
  %852 = vmatprep.subr.mxu0 0.0
  %853 = vmatpush2.msra.mxu0 0.0
  %854 = vmatprep.subr.mxu0 0.0
  %855 = vmatpush2.msra.mxu0 0.0
  %856 = vmatprep.subr.mxu0 0.0
  %857 = vmatpush2.msra.mxu0 0.0
  %858 = vmatprep.subr.mxu0 0.0
  %859 = vmatpush2.msra.mxu0 0.0
  %860 = vmatprep.subr.mxu0 0.0
  %861 = vmatpush2.msra.mxu0 0.0
  %862 = vmatprep.subr.mxu0 0.0
  %863 = vmatpush2.msra.mxu0 0.0
  %864 = vmatprep.subr.mxu0 0.0
  %865 = vmatpush2.msra.mxu0 0.0
  %866 = vmatprep.mubr.f32.mxu0 0.0
  %867 = vmatmul.mubr.f32.gmra.mxu0 %v791
  %v868 = vpop.f32.mrf.mxu0
  %v869 = vadd.f32 0.0, %v868
  %v870 = vpop.f32.mrf.mxu0
  %871 = vmatprep.mubr.f32.mxu0 0.0
  %872 = vmatmul.mubr.f32.gmra.mxu0 %v794
  %v873 = vpop.f32.mrf.mxu0
  %v874 = vadd.f32 0.0, %v873
  %v875 = vpop.f32.mrf.mxu0
  %876 = vmatprep.mubr.f32.mxu0 0.0
  %877 = vmatmul.mubr.f32.gmra.mxu0 %v797
  %v878 = vpop.f32.mrf.mxu0
  %v879 = vadd.f32 0.0, %v878
  %v880 = vpop.f32.mrf.mxu0
  %881 = vmatprep.mubr.f32.mxu0 0.0
  %882 = vmatmul.mubr.f32.gmra.mxu0 %v800
  %v883 = vpop.f32.mrf.mxu0
  %v884 = vadd.f32 0.0, %v883
  %v885 = vpop.f32.mrf.mxu0
  %886 = vdwg.mxu0
  %v888 = vsel %vm789, %v777, 0
  %v891 = vsel %vm789, %v778, 0
  %v894 = vsel %vm789, %v779, 0
  %v897 = vsel %vm789, %v780, 0
  %899 = vmatprep.subr.mxu0 0.0
  %900 = vmatpush1.msra.mxu0 0.0
  %901 = vmatprep.subr.mxu0 0.0
  %902 = vmatpush1.msra.mxu0 0.0
  %903 = vmatprep.subr.mxu0 0.0
  %904 = vmatpush1.msra.mxu0 0.0
  %905 = vmatprep.subr.mxu0 0.0
  %906 = vmatpush1.msra.mxu0 0.0
  %907 = vmatprep.subr.mxu0 0.0
  %908 = vmatpush1.msra.mxu0 0.0
  %909 = vmatprep.subr.mxu0 0.0
  %910 = vmatpush1.msra.mxu0 0.0
  %911 = vmatprep.subr.mxu0 0.0
  %912 = vmatpush1.msra.mxu0 0.0
  %913 = vmatprep.subr.mxu0 0.0
  %914 = vmatpush1.msra.mxu0 0.0
  %915 = vmatprep.subr.mxu0 0.0
  %916 = vmatpush1.msra.mxu0 0.0
  %917 = vmatprep.subr.mxu0 0.0
  %918 = vmatpush1.msra.mxu0 0.0
  %919 = vmatprep.subr.mxu0 0.0
  %920 = vmatpush1.msra.mxu0 0.0
  %921 = vmatprep.subr.mxu0 0.0
  %922 = vmatpush1.msra.mxu0 0.0
  %923 = vmatprep.subr.mxu0 0.0
  %924 = vmatpush1.msra.mxu0 %v764
  %925 = vmatprep.subr.mxu0 0.0
  %926 = vmatpush1.msra.mxu0 %v763
  %927 = vmatprep.subr.mxu0 0.0
  %928 = vmatpush1.msra.mxu0 %v762
  %929 = vmatprep.subr.mxu0 0.0
  %930 = vmatpush1.msra.mxu0 %v761
  %931 = vmatprep.subr.mxu0 0.0
  %932 = vmatpush2.msra.mxu0 0.0
  %933 = vmatprep.subr.mxu0 0.0
  %934 = vmatpush2.msra.mxu0 0.0
  %935 = vmatprep.subr.mxu0 0.0
  %936 = vmatpush2.msra.mxu0 0.0
  %937 = vmatprep.subr.mxu0 0.0
  %938 = vmatpush2.msra.mxu0 0.0
  %939 = vmatprep.subr.mxu0 0.0
  %940 = vmatpush2.msra.mxu0 0.0
  %941 = vmatprep.subr.mxu0 0.0
  %942 = vmatpush2.msra.mxu0 0.0
  %943 = vmatprep.subr.mxu0 0.0
  %944 = vmatpush2.msra.mxu0 0.0
  %945 = vmatprep.subr.mxu0 0.0
  %946 = vmatpush2.msra.mxu0 0.0
  %947 = vmatprep.subr.mxu0 0.0
  %948 = vmatpush2.msra.mxu0 0.0
  %949 = vmatprep.subr.mxu0 0.0
  %950 = vmatpush2.msra.mxu0 0.0
  %951 = vmatprep.subr.mxu0 0.0
  %952 = vmatpush2.msra.mxu0 0.0
  %953 = vmatprep.subr.mxu0 0.0
  %954 = vmatpush2.msra.mxu0 0.0
  %955 = vmatprep.subr.mxu0 0.0
  %956 = vmatpush2.msra.mxu0 0.0
  %957 = vmatprep.subr.mxu0 0.0
  %958 = vmatpush2.msra.mxu0 0.0
  %959 = vmatprep.subr.mxu0 0.0
  %960 = vmatpush2.msra.mxu0 0.0
  %961 = vmatprep.subr.mxu0 0.0
  %962 = vmatpush2.msra.mxu0 0.0
  %963 = vmatprep.mubr.f32.mxu0 0.0
  %964 = vmatmul.mubr.f32.gmra.mxu0 %v888
  %v965 = vpop.f32.mrf.mxu0
  %v966 = vadd.f32 0.0, %v965
  %v967 = vpop.f32.mrf.mxu0
  %968 = vmatprep.mubr.f32.mxu0 0.0
  %969 = vmatmul.mubr.f32.gmra.mxu0 %v891
  %v970 = vpop.f32.mrf.mxu0
  %v971 = vadd.f32 0.0, %v970
  %v972 = vpop.f32.mrf.mxu0
  %973 = vmatprep.mubr.f32.mxu0 0.0
  %974 = vmatmul.mubr.f32.gmra.mxu0 %v894
  %v975 = vpop.f32.mrf.mxu0
  %v976 = vadd.f32 0.0, %v975
  %v977 = vpop.f32.mrf.mxu0
  %978 = vmatprep.mubr.f32.mxu0 0.0
  %979 = vmatmul.mubr.f32.gmra.mxu0 %v897
  %v980 = vpop.f32.mrf.mxu0
  %v981 = vadd.f32 0.0, %v980
  %v982 = vpop.f32.mrf.mxu0
  %983 = vdwg.mxu0
  %v985 = vsel %vm789, %v781, 0
  %v988 = vsel %vm789, %v782, 0
  %v991 = vsel %vm789, %v783, 0
  %v994 = vsel %vm789, %v784, 0
  %996 = vmatprep.subr.mxu0 0.0
  %997 = vmatpush1.msra.mxu0 0.0
  %998 = vmatprep.subr.mxu0 0.0
  %999 = vmatpush1.msra.mxu0 0.0
  %1000 = vmatprep.subr.mxu0 0.0
  %1001 = vmatpush1.msra.mxu0 0.0
  %1002 = vmatprep.subr.mxu0 0.0
  %1003 = vmatpush1.msra.mxu0 0.0
  %1004 = vmatprep.subr.mxu0 0.0
  %1005 = vmatpush1.msra.mxu0 0.0
  %1006 = vmatprep.subr.mxu0 0.0
  %1007 = vmatpush1.msra.mxu0 0.0
  %1008 = vmatprep.subr.mxu0 0.0
  %1009 = vmatpush1.msra.mxu0 0.0
  %1010 = vmatprep.subr.mxu0 0.0
  %1011 = vmatpush1.msra.mxu0 0.0
  %1012 = vmatprep.subr.mxu0 0.0
  %1013 = vmatpush1.msra.mxu0 0.0
  %1014 = vmatprep.subr.mxu0 0.0
  %1015 = vmatpush1.msra.mxu0 0.0
  %1016 = vmatprep.subr.mxu0 0.0
  %1017 = vmatpush1.msra.mxu0 0.0
  %1018 = vmatprep.subr.mxu0 0.0
  %1019 = vmatpush1.msra.mxu0 0.0
  %1020 = vmatprep.subr.mxu0 0.0
  %1021 = vmatpush1.msra.mxu0 %v768
  %1022 = vmatprep.subr.mxu0 0.0
  %1023 = vmatpush1.msra.mxu0 %v767
  %1024 = vmatprep.subr.mxu0 0.0
  %1025 = vmatpush1.msra.mxu0 %v766
  %1026 = vmatprep.subr.mxu0 0.0
  %1027 = vmatpush1.msra.mxu0 %v765
  %1028 = vmatprep.subr.mxu0 0.0
  %1029 = vmatpush2.msra.mxu0 0.0
  %1030 = vmatprep.subr.mxu0 0.0
  %1031 = vmatpush2.msra.mxu0 0.0
  %1032 = vmatprep.subr.mxu0 0.0
  %1033 = vmatpush2.msra.mxu0 0.0
  %1034 = vmatprep.subr.mxu0 0.0
  %1035 = vmatpush2.msra.mxu0 0.0
  %1036 = vmatprep.subr.mxu0 0.0
  %1037 = vmatpush2.msra.mxu0 0.0
  %1038 = vmatprep.subr.mxu0 0.0
  %1039 = vmatpush2.msra.mxu0 0.0
  %1040 = vmatprep.subr.mxu0 0.0
  %1041 = vmatpush2.msra.mxu0 0.0
  %1042 = vmatprep.subr.mxu0 0.0
  %1043 = vmatpush2.msra.mxu0 0.0
  %1044 = vmatprep.subr.mxu0 0.0
  %1045 = vmatpush2.msra.mxu0 0.0
  %1046 = vmatprep.subr.mxu0 0.0
  %1047 = vmatpush2.msra.mxu0 0.0
  %1048 = vmatprep.subr.mxu0 0.0
  %1049 = vmatpush2.msra.mxu0 0.0
  %1050 = vmatprep.subr.mxu0 0.0
  %1051 = vmatpush2.msra.mxu0 0.0
  %1052 = vmatprep.subr.mxu0 0.0
  %1053 = vmatpush2.msra.mxu0 0.0
  %1054 = vmatprep.subr.mxu0 0.0
  %1055 = vmatpush2.msra.mxu0 0.0
  %1056 = vmatprep.subr.mxu0 0.0
  %1057 = vmatpush2.msra.mxu0 0.0
  %1058 = vmatprep.subr.mxu0 0.0
  %1059 = vmatpush2.msra.mxu0 0.0
  %1060 = vmatprep.mubr.f32.mxu0 0.0
  %1061 = vmatmul.mubr.f32.gmra.mxu0 %v985
  %v1062 = vpop.f32.mrf.mxu0
  %v1063 = vadd.f32 0.0, %v1062
  %v1064 = vpop.f32.mrf.mxu0
  %1065 = vmatprep.mubr.f32.mxu0 0.0
  %1066 = vmatmul.mubr.f32.gmra.mxu0 %v988
  %v1067 = vpop.f32.mrf.mxu0
  %v1068 = vadd.f32 0.0, %v1067
  %v1069 = vpop.f32.mrf.mxu0
  %1070 = vmatprep.mubr.f32.mxu0 0.0
  %1071 = vmatmul.mubr.f32.gmra.mxu0 %v991
  %v1072 = vpop.f32.mrf.mxu0
  %v1073 = vadd.f32 0.0, %v1072
  %v1074 = vpop.f32.mrf.mxu0
  %1075 = vmatprep.mubr.f32.mxu0 0.0
  %1076 = vmatmul.mubr.f32.gmra.mxu0 %v994
  %v1077 = vpop.f32.mrf.mxu0
  %v1078 = vadd.f32 0.0, %v1077
  %v1079 = vpop.f32.mrf.mxu0
  %1080 = vdwg.mxu0
  %v1082 = vsel %vm789, %v785, 0
  %v1085 = vsel %vm789, %v786, 0
  %v1088 = vsel %vm789, %v787, 0
  %v1091 = vsel %vm789, %v788, 0
  %1093 = vmatprep.subr.mxu0 0.0
  %1094 = vmatpush1.msra.mxu0 0.0
  %1095 = vmatprep.subr.mxu0 0.0
  %1096 = vmatpush1.msra.mxu0 0.0
  %1097 = vmatprep.subr.mxu0 0.0
  %1098 = vmatpush1.msra.mxu0 0.0
  %1099 = vmatprep.subr.mxu0 0.0
  %1100 = vmatpush1.msra.mxu0 0.0
  %1101 = vmatprep.subr.mxu0 0.0
  %1102 = vmatpush1.msra.mxu0 0.0
  %1103 = vmatprep.subr.mxu0 0.0
  %1104 = vmatpush1.msra.mxu0 0.0
  %1105 = vmatprep.subr.mxu0 0.0
  %1106 = vmatpush1.msra.mxu0 0.0
  %1107 = vmatprep.subr.mxu0 0.0
  %1108 = vmatpush1.msra.mxu0 0.0
  %1109 = vmatprep.subr.mxu0 0.0
  %1110 = vmatpush1.msra.mxu0 0.0
  %1111 = vmatprep.subr.mxu0 0.0
  %1112 = vmatpush1.msra.mxu0 0.0
  %1113 = vmatprep.subr.mxu0 0.0
  %1114 = vmatpush1.msra.mxu0 0.0
  %1115 = vmatprep.subr.mxu0 0.0
  %1116 = vmatpush1.msra.mxu0 0.0
  %1117 = vmatprep.subr.mxu0 0.0
  %1118 = vmatpush1.msra.mxu0 %v772
  %1119 = vmatprep.subr.mxu0 0.0
  %1120 = vmatpush1.msra.mxu0 %v771
  %1121 = vmatprep.subr.mxu0 0.0
  %1122 = vmatpush1.msra.mxu0 %v770
  %1123 = vmatprep.subr.mxu0 0.0
  %1124 = vmatpush1.msra.mxu0 %v769
  %1125 = vmatprep.subr.mxu0 0.0
  %1126 = vmatpush2.msra.mxu0 0.0
  %1127 = vmatprep.subr.mxu0 0.0
  %1128 = vmatpush2.msra.mxu0 0.0
  %1129 = vmatprep.subr.mxu0 0.0
  %1130 = vmatpush2.msra.mxu0 0.0
  %1131 = vmatprep.subr.mxu0 0.0
  %1132 = vmatpush2.msra.mxu0 0.0
  %1133 = vmatprep.subr.mxu0 0.0
  %1134 = vmatpush2.msra.mxu0 0.0
  %1135 = vmatprep.subr.mxu0 0.0
  %1136 = vmatpush2.msra.mxu0 0.0
  %1137 = vmatprep.subr.mxu0 0.0
  %1138 = vmatpush2.msra.mxu0 0.0
  %1139 = vmatprep.subr.mxu0 0.0
  %1140 = vmatpush2.msra.mxu0 0.0
  %1141 = vmatprep.subr.mxu0 0.0
  %1142 = vmatpush2.msra.mxu0 0.0
  %1143 = vmatprep.subr.mxu0 0.0
  %1144 = vmatpush2.msra.mxu0 0.0
  %1145 = vmatprep.subr.mxu0 0.0
  %1146 = vmatpush2.msra.mxu0 0.0
  %1147 = vmatprep.subr.mxu0 0.0
  %1148 = vmatpush2.msra.mxu0 0.0
  %1149 = vmatprep.subr.mxu0 0.0
  %1150 = vmatpush2.msra.mxu0 0.0
  %1151 = vmatprep.subr.mxu0 0.0
  %1152 = vmatpush2.msra.mxu0 0.0
  %1153 = vmatprep.subr.mxu0 0.0
  %1154 = vmatpush2.msra.mxu0 0.0
  %1155 = vmatprep.subr.mxu0 0.0
  %1156 = vmatpush2.msra.mxu0 0.0
  %1157 = vmatprep.mubr.f32.mxu0 0.0
  %1158 = vmatmul.mubr.f32.gmra.mxu0 %v1082
  %v1159 = vpop.f32.mrf.mxu0
  %v1160 = vadd.f32 0.0, %v1159
  %v1161 = vpop.f32.mrf.mxu0
  %1162 = vmatprep.mubr.f32.mxu0 0.0
  %1163 = vmatmul.mubr.f32.gmra.mxu0 %v1085
  %v1164 = vpop.f32.mrf.mxu0
  %v1165 = vadd.f32 0.0, %v1164
  %v1166 = vpop.f32.mrf.mxu0
  %1167 = vmatprep.mubr.f32.mxu0 0.0
  %1168 = vmatmul.mubr.f32.gmra.mxu0 %v1088
  %v1169 = vpop.f32.mrf.mxu0
  %v1170 = vadd.f32 0.0, %v1169
  %v1171 = vpop.f32.mrf.mxu0
  %1172 = vmatprep.mubr.f32.mxu0 0.0
  %1173 = vmatmul.mubr.f32.gmra.mxu0 %v1091
  %v1174 = vpop.f32.mrf.mxu0
  %v1175 = vadd.f32 0.0, %v1174
  %v1176 = vpop.f32.mrf.mxu0
  %1177 = vdwg.mxu0
  %v1178 = vsel %vm60, %v869, 0.0
  %1179 = vadd.xlane.f32.xlu0 %v1178
  %v1180 = vpop.xlane.xlu0 %1179
  %v1181 = vsel %vm60, %v874, 0.0
  %1182 = vadd.xlane.f32.xlu0 %v1181
  %v1183 = vpop.xlane.xlu0 %1182
  %v1184 = vsel %vm60, %v879, 0.0
  %1185 = vadd.xlane.f32.xlu0 %v1184
  %v1186 = vpop.xlane.xlu0 %1185
  %v1187 = vsel %vm60, %v884, 0.0
  %1188 = vadd.xlane.f32.xlu0 %v1187
  %v1189 = vpop.xlane.xlu0 %1188
  %v1190 = vsel %vm60, %v966, 0.0
  %1191 = vadd.xlane.f32.xlu0 %v1190
  %v1192 = vpop.xlane.xlu0 %1191
  %v1193 = vsel %vm60, %v971, 0.0
  %1194 = vadd.xlane.f32.xlu0 %v1193
  %v1195 = vpop.xlane.xlu0 %1194
  %v1196 = vsel %vm60, %v976, 0.0
  %1197 = vadd.xlane.f32.xlu0 %v1196
  %v1198 = vpop.xlane.xlu0 %1197
  %v1199 = vsel %vm60, %v981, 0.0
  %1200 = vadd.xlane.f32.xlu0 %v1199
  %v1201 = vpop.xlane.xlu0 %1200
  %v1202 = vsel %vm60, %v1063, 0.0
  %1203 = vadd.xlane.f32.xlu0 %v1202
  %v1204 = vpop.xlane.xlu0 %1203
  %v1205 = vsel %vm60, %v1068, 0.0
  %1206 = vadd.xlane.f32.xlu0 %v1205
  %v1207 = vpop.xlane.xlu0 %1206
  %v1208 = vsel %vm60, %v1073, 0.0
  %1209 = vadd.xlane.f32.xlu0 %v1208
  %v1210 = vpop.xlane.xlu0 %1209
  %v1211 = vsel %vm60, %v1078, 0.0
  %1212 = vadd.xlane.f32.xlu0 %v1211
  %v1213 = vpop.xlane.xlu0 %1212
  %v1214 = vsel %vm60, %v1160, 0.0
  %1215 = vadd.xlane.f32.xlu0 %v1214
  %v1216 = vpop.xlane.xlu0 %1215
  %v1217 = vsel %vm60, %v1165, 0.0
  %1218 = vadd.xlane.f32.xlu0 %v1217
  %v1219 = vpop.xlane.xlu0 %1218
  %v1220 = vsel %vm60, %v1170, 0.0
  %1221 = vadd.xlane.f32.xlu0 %v1220
  %v1222 = vpop.xlane.xlu0 %1221
  %v1223 = vsel %vm60, %v1175, 0.0
  %1224 = vadd.xlane.f32.xlu0 %v1223
  %v1225 = vpop.xlane.xlu0 %1224
  %v1226 = vadd.f32 %v1180, %v1183
  %v1227 = vadd.f32 %v1226, %v1186
  %v1228 = vadd.f32 %v1227, %v1189
  %v1229 = vrot.slane %v1228, 4
  %v1230 = vadd.f32 %v1228, %v1229
  %v1231 = vrot.slane %v1230, 2
  %v1232 = vadd.f32 %v1230, %v1231
  %v1233 = vrot.slane %v1232, 1
  %v1234 = vadd.f32 %v1232, %v1233
  %v1235 = vadd.f32 %v1192, %v1195
  %v1236 = vadd.f32 %v1235, %v1198
  %v1237 = vadd.f32 %v1236, %v1201
  %v1238 = vrot.slane %v1237, 4
  %v1239 = vadd.f32 %v1237, %v1238
  %v1240 = vrot.slane %v1239, 2
  %v1241 = vadd.f32 %v1239, %v1240
  %v1242 = vrot.slane %v1241, 1
  %v1243 = vadd.f32 %v1241, %v1242
  %v1244 = vadd.f32 %v1204, %v1207
  %v1245 = vadd.f32 %v1244, %v1210
  %v1246 = vadd.f32 %v1245, %v1213
  %v1247 = vrot.slane %v1246, 4
  %v1248 = vadd.f32 %v1246, %v1247
  %v1249 = vrot.slane %v1248, 2
  %v1250 = vadd.f32 %v1248, %v1249
  %v1251 = vrot.slane %v1250, 1
  %v1252 = vadd.f32 %v1250, %v1251
  %v1253 = vadd.f32 %v1216, %v1219
  %v1254 = vadd.f32 %v1253, %v1222
  %v1255 = vadd.f32 %v1254, %v1225
  %v1256 = vrot.slane %v1255, 4
  %v1257 = vadd.f32 %v1255, %v1256
  %v1258 = vrot.slane %v1257, 2
  %v1259 = vadd.f32 %v1257, %v1258
  %v1260 = vrot.slane %v1259, 1
  %v1261 = vadd.f32 %v1259, %v1260
  %v1262 = vmul.f32 %v1234, 0.001953125
  %v1263 = vmul.f32 %v1243, 0.001953125
  %v1264 = vmul.f32 %v1252, 0.001953125
  %v1265 = vmul.f32 %v1261, 0.001953125
  %v1266 = vsub.f32 %v869, %v1262
  %v1267 = vsub.f32 %v874, %v1262
  %v1268 = vsub.f32 %v879, %v1262
  %v1269 = vsub.f32 %v884, %v1262
  %v1270 = vsub.f32 %v966, %v1263
  %v1271 = vsub.f32 %v971, %v1263
  %v1272 = vsub.f32 %v976, %v1263
  %v1273 = vsub.f32 %v981, %v1263
  %v1274 = vsub.f32 %v1063, %v1264
  %v1275 = vsub.f32 %v1068, %v1264
  %v1276 = vsub.f32 %v1073, %v1264
  %v1277 = vsub.f32 %v1078, %v1264
  %v1278 = vsub.f32 %v1160, %v1265
  %v1279 = vsub.f32 %v1165, %v1265
  %v1280 = vsub.f32 %v1170, %v1265
  %v1281 = vsub.f32 %v1175, %v1265
  %v1282 = vmul.f32 %v1266, %v1266
  %v1283 = vmul.f32 %v1267, %v1267
  %v1284 = vmul.f32 %v1268, %v1268
  %v1285 = vmul.f32 %v1269, %v1269
  %v1286 = vmul.f32 %v1270, %v1270
  %v1287 = vmul.f32 %v1271, %v1271
  %v1288 = vmul.f32 %v1272, %v1272
  %v1289 = vmul.f32 %v1273, %v1273
  %v1290 = vmul.f32 %v1274, %v1274
  %v1291 = vmul.f32 %v1275, %v1275
  %v1292 = vmul.f32 %v1276, %v1276
  %v1293 = vmul.f32 %v1277, %v1277
  %v1294 = vmul.f32 %v1278, %v1278
  %v1295 = vmul.f32 %v1279, %v1279
  %v1296 = vmul.f32 %v1280, %v1280
  %v1297 = vmul.f32 %v1281, %v1281
  %v1298 = vsel %vm60, %v1282, 0.0
  %1299 = vadd.xlane.f32.xlu0 %v1298
  %v1300 = vpop.xlane.xlu0 %1299
  %v1301 = vsel %vm60, %v1283, 0.0
  %1302 = vadd.xlane.f32.xlu0 %v1301
  %v1303 = vpop.xlane.xlu0 %1302
  %v1304 = vsel %vm60, %v1284, 0.0
  %1305 = vadd.xlane.f32.xlu0 %v1304
  %v1306 = vpop.xlane.xlu0 %1305
  %v1307 = vsel %vm60, %v1285, 0.0
  %1308 = vadd.xlane.f32.xlu0 %v1307
  %v1309 = vpop.xlane.xlu0 %1308
  %v1310 = vsel %vm60, %v1286, 0.0
  %1311 = vadd.xlane.f32.xlu0 %v1310
  %v1312 = vpop.xlane.xlu0 %1311
  %v1313 = vsel %vm60, %v1287, 0.0
  %1314 = vadd.xlane.f32.xlu0 %v1313
  %v1315 = vpop.xlane.xlu0 %1314
  %v1316 = vsel %vm60, %v1288, 0.0
  %1317 = vadd.xlane.f32.xlu0 %v1316
  %v1318 = vpop.xlane.xlu0 %1317
  %v1319 = vsel %vm60, %v1289, 0.0
  %1320 = vadd.xlane.f32.xlu0 %v1319
  %v1321 = vpop.xlane.xlu0 %1320
  %v1322 = vsel %vm60, %v1290, 0.0
  %1323 = vadd.xlane.f32.xlu0 %v1322
  %v1324 = vpop.xlane.xlu0 %1323
  %v1325 = vsel %vm60, %v1291, 0.0
  %1326 = vadd.xlane.f32.xlu0 %v1325
  %v1327 = vpop.xlane.xlu0 %1326
  %v1328 = vsel %vm60, %v1292, 0.0
  %1329 = vadd.xlane.f32.xlu0 %v1328
  %v1330 = vpop.xlane.xlu0 %1329
  %v1331 = vsel %vm60, %v1293, 0.0
  %1332 = vadd.xlane.f32.xlu0 %v1331
  %v1333 = vpop.xlane.xlu0 %1332
  %v1334 = vsel %vm60, %v1294, 0.0
  %1335 = vadd.xlane.f32.xlu0 %v1334
  %v1336 = vpop.xlane.xlu0 %1335
  %v1337 = vsel %vm60, %v1295, 0.0
  %1338 = vadd.xlane.f32.xlu0 %v1337
  %v1339 = vpop.xlane.xlu0 %1338
  %v1340 = vsel %vm60, %v1296, 0.0
  %1341 = vadd.xlane.f32.xlu0 %v1340
  %v1342 = vpop.xlane.xlu0 %1341
  %v1343 = vsel %vm60, %v1297, 0.0
  %1344 = vadd.xlane.f32.xlu0 %v1343
  %v1345 = vpop.xlane.xlu0 %1344
  %v1346 = vadd.f32 %v1300, %v1303
  %v1347 = vadd.f32 %v1346, %v1306
  %v1348 = vadd.f32 %v1347, %v1309
  %v1349 = vrot.slane %v1348, 4
  %v1350 = vadd.f32 %v1348, %v1349
  %v1351 = vrot.slane %v1350, 2
  %v1352 = vadd.f32 %v1350, %v1351
  %v1353 = vrot.slane %v1352, 1
  %v1354 = vadd.f32 %v1352, %v1353
  %v1355 = vadd.f32 %v1312, %v1315
  %v1356 = vadd.f32 %v1355, %v1318
  %v1357 = vadd.f32 %v1356, %v1321
  %v1358 = vrot.slane %v1357, 4
  %v1359 = vadd.f32 %v1357, %v1358
  %v1360 = vrot.slane %v1359, 2
  %v1361 = vadd.f32 %v1359, %v1360
  %v1362 = vrot.slane %v1361, 1
  %v1363 = vadd.f32 %v1361, %v1362
  %v1364 = vadd.f32 %v1324, %v1327
  %v1365 = vadd.f32 %v1364, %v1330
  %v1366 = vadd.f32 %v1365, %v1333
  %v1367 = vrot.slane %v1366, 4
  %v1368 = vadd.f32 %v1366, %v1367
  %v1369 = vrot.slane %v1368, 2
  %v1370 = vadd.f32 %v1368, %v1369
  %v1371 = vrot.slane %v1370, 1
  %v1372 = vadd.f32 %v1370, %v1371
  %v1373 = vadd.f32 %v1336, %v1339
  %v1374 = vadd.f32 %v1373, %v1342
  %v1375 = vadd.f32 %v1374, %v1345
  %v1376 = vrot.slane %v1375, 4
  %v1377 = vadd.f32 %v1375, %v1376
  %v1378 = vrot.slane %v1377, 2
  %v1379 = vadd.f32 %v1377, %v1378
  %v1380 = vrot.slane %v1379, 1
  %v1381 = vadd.f32 %v1379, %v1380
  %v1382 = vmul.f32 %v1354, 0.001953125
  %v1383 = vmul.f32 %v1363, 0.001953125
  %v1384 = vmul.f32 %v1372, 0.001953125
  %v1385 = vmul.f32 %v1381, 0.001953125
  %v1386 = vadd.f32 %v1382, 1e-05
  %v1387 = vadd.f32 %v1383, 1e-05
  %v1388 = vadd.f32 %v1384, 1e-05
  %v1389 = vadd.f32 %v1385, 1e-05
  %v1390 = vrsqrt.pop %v1386
  %v1391 = vrsqrt.pop %v1387
  %v1392 = vrsqrt.pop %v1388
  %v1393 = vrsqrt.pop %v1389
  %v1394 = vmul.f32 %v43, %v1390
  %v1395 = vmul.f32 %v44, %v1391
  %v1396 = vmul.f32 %v45, %v1392
  %v1397 = vmul.f32 %v46, %v1393
  %v1402 = vlaneseq
  %v1403 = vshrl.u32 %v1402, 7
  %v1404 = vsub.s32 0, %v1403
  %v1405 = vrot.slane %v1394, %v1404
  %v1406 = vlaneseq
  %v1407 = vshrl.u32 %v1406, 7
  %v1408 = vsub.s32 0, %v1407
  %v1409 = vrot.slane %v1395, %v1408
  %v1410 = vlaneseq
  %v1411 = vshrl.u32 %v1410, 7
  %v1412 = vsub.s32 0, %v1411
  %v1413 = vrot.slane %v1396, %v1412
  %v1414 = vlaneseq
  %v1415 = vshrl.u32 %v1414, 7
  %v1416 = vsub.s32 0, %v1415
  %v1417 = vrot.slane %v1397, %v1416
  %1418 = vset.pattern.permute.xlu0 0
  %1419 = vperm.xlu0 %1418, %v1405
  %v1420 = vpop.permute.xlu0 %1419
  %1422 = vset.pattern.permute.xlu0 0
  %1423 = vperm.xlu0 %1422, %v1409
  %v1424 = vpop.permute.xlu0 %1423
  %1426 = vset.pattern.permute.xlu0 0
  %1427 = vperm.xlu0 %1426, %v1413
  %v1428 = vpop.permute.xlu0 %1427
  %1430 = vset.pattern.permute.xlu0 0
  %1431 = vperm.xlu0 %1430, %v1417
  %v1432 = vpop.permute.xlu0 %1431
  %v1434 = vmul.f32 %v1266, %v1420
  %v1435 = vmul.f32 %v1267, %v1420
  %v1436 = vmul.f32 %v1268, %v1420
  %v1437 = vmul.f32 %v1269, %v1420
  %v1438 = vmul.f32 %v1270, %v1424
  %v1439 = vmul.f32 %v1271, %v1424
  %v1440 = vmul.f32 %v1272, %v1424
  %v1441 = vmul.f32 %v1273, %v1424
  %v1442 = vmul.f32 %v1274, %v1428
  %v1443 = vmul.f32 %v1275, %v1428
  %v1444 = vmul.f32 %v1276, %v1428
  %v1445 = vmul.f32 %v1277, %v1428
  %v1446 = vmul.f32 %v1278, %v1432
  %v1447 = vmul.f32 %v1279, %v1432
  %v1448 = vmul.f32 %v1280, %v1432
  %v1449 = vmul.f32 %v1281, %v1432
  %v1454 = vlaneseq
  %v1455 = vshrl.u32 %v1454, 7
  %v1456 = vsub.s32 0, %v1455
  %v1457 = vrot.slane %v48, %v1456
  %v1458 = vlaneseq
  %v1459 = vshrl.u32 %v1458, 7
  %v1460 = vsub.s32 0, %v1459
  %v1461 = vrot.slane %v49, %v1460
  %v1462 = vlaneseq
  %v1463 = vshrl.u32 %v1462, 7
  %v1464 = vsub.s32 0, %v1463
  %v1465 = vrot.slane %v50, %v1464
  %v1466 = vlaneseq
  %v1467 = vshrl.u32 %v1466, 7
  %v1468 = vsub.s32 0, %v1467
  %v1469 = vrot.slane %v51, %v1468
  %1470 = vset.pattern.permute.xlu0 0
  %1471 = vperm.xlu0 %1470, %v1457
  %v1472 = vpop.permute.xlu0 %1471
  %1474 = vset.pattern.permute.xlu0 0
  %1475 = vperm.xlu0 %1474, %v1461
  %v1476 = vpop.permute.xlu0 %1475
  %1478 = vset.pattern.permute.xlu0 0
  %1479 = vperm.xlu0 %1478, %v1465
  %v1480 = vpop.permute.xlu0 %1479
  %1482 = vset.pattern.permute.xlu0 0
  %1483 = vperm.xlu0 %1482, %v1469
  %v1484 = vpop.permute.xlu0 %1483
  %v1486 = vadd.f32 %v1434, %v1472
  %v1487 = vadd.f32 %v1435, %v1472
  %v1488 = vadd.f32 %v1436, %v1472
  %v1489 = vadd.f32 %v1437, %v1472
  %v1490 = vadd.f32 %v1438, %v1476
  %v1491 = vadd.f32 %v1439, %v1476
  %v1492 = vadd.f32 %v1440, %v1476
  %v1493 = vadd.f32 %v1441, %v1476
  %v1494 = vadd.f32 %v1442, %v1480
  %v1495 = vadd.f32 %v1443, %v1480
  %v1496 = vadd.f32 %v1444, %v1480
  %v1497 = vadd.f32 %v1445, %v1480
  %v1498 = vadd.f32 %v1446, %v1484
  %v1499 = vadd.f32 %v1447, %v1484
  %v1500 = vadd.f32 %v1448, %v1484
  %v1501 = vadd.f32 %v1449, %v1484
  %v1502 = vadd.f32 %v1486, %v17
  %v1503 = vadd.f32 %v1487, %v18
  %v1504 = vadd.f32 %v1488, %v19
  %v1505 = vadd.f32 %v1489, %v20
  %v1506 = vadd.f32 %v1490, %v21
  %v1507 = vadd.f32 %v1491, %v22
  %v1508 = vadd.f32 %v1492, %v23
  %v1509 = vadd.f32 %v1493, %v24
  %v1510 = vadd.f32 %v1494, %v25
  %v1511 = vadd.f32 %v1495, %v26
  %v1512 = vadd.f32 %v1496, %v27
  %v1513 = vadd.f32 %v1497, %v28
  %v1514 = vadd.f32 %v1498, %v29
  %v1515 = vadd.f32 %v1499, %v30
  %v1516 = vadd.f32 %v1500, %v31
  %v1517 = vadd.f32 %v1501, %v32
  %v1518 = vmax.f32 %v1502, 0.0
  %v1519 = vmax.f32 %v1503, 0.0
  %v1520 = vmax.f32 %v1504, 0.0
  %v1521 = vmax.f32 %v1505, 0.0
  %v1522 = vmax.f32 %v1506, 0.0
  %v1523 = vmax.f32 %v1507, 0.0
  %v1524 = vmax.f32 %v1508, 0.0
  %v1525 = vmax.f32 %v1509, 0.0
  %v1526 = vmax.f32 %v1510, 0.0
  %v1527 = vmax.f32 %v1511, 0.0
  %v1528 = vmax.f32 %v1512, 0.0
  %v1529 = vmax.f32 %v1513, 0.0
  %v1530 = vmax.f32 %v1514, 0.0
  %v1531 = vmax.f32 %v1515, 0.0
  %v1532 = vmax.f32 %v1516, 0.0
  %v1533 = vmax.f32 %v1517, 0.0
  %1534 = vst.msk [vmem:[%s4] sm:$0xff] %vm60, %v1518
  %1535 = vst.msk [vmem:[%s4 + $0x8] sm:$0xff] %vm60, %v1519
  %1536 = vst.msk [vmem:[%s4 + $0x10] sm:$0xff] %vm60, %v1520
  %1537 = vst.msk [vmem:[%s4 + $0x18] sm:$0xff] %vm60, %v1521
  %1538 = vst.msk [vmem:[%s4 + $0x20] sm:$0xff] %vm60, %v1522
  %1539 = vst.msk [vmem:[%s4 + $0x28] sm:$0xff] %vm60, %v1523
  %1540 = vst.msk [vmem:[%s4 + $0x30] sm:$0xff] %vm60, %v1524
  %1541 = vst.msk [vmem:[%s4 + $0x38] sm:$0xff] %vm60, %v1525
  %1542 = vst.msk [vmem:[%s4 + $0x40] sm:$0xff] %vm60, %v1526
  %1543 = vst.msk [vmem:[%s4 + $0x48] sm:$0xff] %vm60, %v1527
  %1544 = vst.msk [vmem:[%s4 + $0x50] sm:$0xff] %vm60, %v1528
  %1545 = vst.msk [vmem:[%s4 + $0x58] sm:$0xff] %vm60, %v1529
  %1546 = vst.msk [vmem:[%s4 + $0x60] sm:$0xff] %vm60, %v1530
  %1547 = vst.msk [vmem:[%s4 + $0x68] sm:$0xff] %vm60, %v1531
  %1548 = vst.msk [vmem:[%s4 + $0x70] sm:$0xff] %vm60, %v1532
  %1549 = vst.msk [vmem:[%s4 + $0x78] sm:$0xff] %vm60, %v1533
  // Predicated region
  $region18: #{shuffle_plug_forward.1} parent=0 // pred_check
    _
  $region19: #{shuffle_plug_forward.1} parent=0 // pred_check_branch
    %1551 = sbr.rel (0) target = $region21
  $region20: #{shuffle_plug_forward.1} parent=0 // pred_region
    _
  $region21: #{shuffle_plug_forward.1} parent=0 // pred_fallthru
    _
  // Predicated region
  $region22: #{shuffle_plug_forward.1} parent=0 // pred_check
    _
  $region23: #{shuffle_plug_forward.1} parent=0 // pred_check_branch
    %1553 = sbr.rel (0) target = $region25
  $region24: #{shuffle_plug_forward.1} parent=0 // pred_region
    _
  $region25: #{shuffle_plug_forward.1} parent=0 // pred_fallthru
    _

</llo_original>
